<compile_context>
chip_gen: v6e
topology: v6e:2x2x1
jax: 0.10.0
libtpu: 0.0.40
codegen_flags: <defaults>
</compile_context>

<pallas_src>
import functools

import jax
import jax.numpy as jnp
import numpy as np
from jax import lax
from jax.experimental import pallas as pl
from jax.experimental.pallas import tpu as pltpu

LANE = 128
SUB = 8


def lstm_kernel(x_ref, w_ih_ref, w_hh_ref, b_ref, w_fc_ref, b_fc_ref, out_ref):
    # x_ref:    (T, Bp, 1)   time-major input, batch padded to sublane multiple
    # w_ih_ref: (1, 4*Hp)    W_ih^T (input_size=1), gate blocks lane-padded to Hp
    # w_hh_ref: (Hp, 4*Hp)   W_hh^T, rows + gate blocks zero-padded
    # b_ref:    (1, 4*Hp)    b_ih + b_hh, gate blocks lane-padded
    # w_fc_ref: (Hp, Op)     W_fc^T zero-padded
    # b_fc_ref: (1, Op)
    # out_ref:  (Bp, Op)
    T = x_ref.shape[0]
    B = x_ref.shape[1]
    Hp = w_hh_ref.shape[0]

    # Tiny (1, 4*Hp) rows, hoisted once.
    w_ih_row = w_ih_ref[...]
    b_row = b_ref[...]

    # Recurrent state lives in vregs (no VMEM scratch round-trips).
    h = jnp.zeros((B, Hp), jnp.float32)
    c = jnp.zeros((B, Hp), jnp.float32)

    def sigm(v):
        # Single-EUP logistic: sigmoid(x) == 0.5 * tanh(0.5 * x) + 0.5
        return 0.5 * jnp.tanh(0.5 * v) + 0.5

    # Fully unrolled T-step recurrence (T small and static).
    # Padded lanes stay exactly zero: padded gate pre-activations are 0, so
    # c_pad = 0.5*c_pad + 0.5*0 = 0 and h_pad = 0.5*tanh(0) = 0.
    for t in range(T):
        # Per-step input projection: 2 VPU ops independent of h -> hides under the MXU.
        x_proj_t = x_ref[t] * w_ih_row + b_row          # (B,1)*(1,4Hp)+(1,4Hp) -> (B,4Hp)
        if t == 0:
            gates = x_proj_t                            # h0 == 0: recurrent term exactly 0
        else:
            gates = x_proj_t + jnp.dot(h, w_hh_ref[...],
                                       preferred_element_type=jnp.float32)
        i_g = sigm(gates[:, 0 * Hp:1 * Hp])             # aligned 128-lane gate blocks
        f_g = sigm(gates[:, 1 * Hp:2 * Hp])
        g_g = jnp.tanh(gates[:, 2 * Hp:3 * Hp])
        o_g = sigm(gates[:, 3 * Hp:4 * Hp])
        c = f_g * c + i_g * g_g
        h = o_g * jnp.tanh(c)

    # Final fully-connected layer on the last hidden state (lane-dense output store).
    out_ref[...] = (jnp.dot(h, w_fc_ref[...], preferred_element_type=jnp.float32)
                    + b_fc_ref[...])


def prepare_params(params):
    """One-time layout glue: pad gate blocks to 128 lanes, transpose, fold biases."""
    w_ih, w_hh, b_ih, b_hh, w_fc, b_fc = params
    H = int(w_hh.shape[1])
    O = int(w_fc.shape[0])
    Hp = ((H + LANE - 1) // LANE) * LANE
    Op = ((O + LANE - 1) // LANE) * LANE

    def pad_gate_cols(w_t):
        # (K, 4H) -> (K, 4*Hp): each of the i/f/g/o blocks padded to Hp lanes.
        K = w_t.shape[0]
        return (jnp.zeros((K, 4, Hp), jnp.float32)
                .at[:, :, :H].set(w_t.reshape(K, 4, H))
                .reshape(K, 4 * Hp))

    w_ih_p = pad_gate_cols(jnp.asarray(w_ih, jnp.float32).T)              # (1, 4*Hp)
    b_p = pad_gate_cols((jnp.asarray(b_ih, jnp.float32)
                         + jnp.asarray(b_hh, jnp.float32))[None, :])      # (1, 4*Hp)
    w_hh_p = (jnp.zeros((Hp, 4 * Hp), jnp.float32)
              .at[:H].set(pad_gate_cols(jnp.asarray(w_hh, jnp.float32).T)))  # (Hp, 4*Hp)
    w_fc_p = (jnp.zeros((Hp, Op), jnp.float32)
              .at[:H, :O].set(jnp.asarray(w_fc, jnp.float32).T))          # (Hp, Op)
    b_fc_p = jnp.zeros((1, Op), jnp.float32).at[0, :O].set(
        jnp.asarray(b_fc, jnp.float32))                                   # (1, Op)

    arrays = (w_ih_p, w_hh_p, b_p, w_fc_p, b_fc_p)
    arrays = tuple(jax.device_put(a) for a in arrays)
    return {"arrays": arrays, "O": O}


@functools.partial(jax.jit, static_argnames=("O",))
def _forward_impl(x, w_ih_p, w_hh_p, b_p, w_fc_p, b_fc_p, *, O):
    B, T = x.shape
    Bp = ((B + SUB - 1) // SUB) * SUB
    Op = w_fc_p.shape[1]

    # Only per-call glue: time-major, sublane-padded input.
    x_tm = jnp.zeros((T, Bp, 1), jnp.float32).at[:, :B, 0].set(x.T)

    vmem = pl.BlockSpec(memory_space=pltpu.MemorySpace.VMEM)
    out_pad = pl.pallas_call(
        lstm_kernel,
        out_shape=jax.ShapeDtypeStruct((Bp, Op), jnp.float32),
        in_specs=[vmem] * 6,
        out_specs=vmem,
    )(x_tm, w_ih_p, w_hh_p, b_p, w_fc_p, b_fc_p)
    return out_pad[:B, :O]


def lstm_net_forward(x, packed):
    """x: (batch, seq) float32; packed: output of prepare_params()."""
    return _forward_impl(x, *packed["arrays"], O=packed["O"])


def reference_forward(x, params):
    """Pure-JAX reference reproducing torch.nn.LSTM(batch_first) + Linear semantics."""
    w_ih, w_hh, b_ih, b_hh, w_fc, b_fc = params
    B = x.shape[0]
    H = w_hh.shape[1]
    xt = x[:, :, None]  # (B, T, 1)

    def step(carry, x_t):
        h, c = carry
        gates = x_t @ w_ih.T + b_ih + h @ w_hh.T + b_hh
        i = jax.nn.sigmoid(gates[:, 0:H])
        f = jax.nn.sigmoid(gates[:, H:2 * H])
        g = jnp.tanh(gates[:, 2 * H:3 * H])
        o = jax.nn.sigmoid(gates[:, 3 * H:4 * H])
        c = f * c + i * g
        h = o * jnp.tanh(c)
        return (h, c), None

    h0 = jnp.zeros((B, H), jnp.float32)
    c0 = jnp.zeros((B, H), jnp.float32)
    (h_last, _), _ = lax.scan(step, (h0, c0), jnp.transpose(xt, (1, 0, 2)))
    return h_last @ w_fc.T + b_fc


def init_params(key, input_size, hidden_size, output_size):
    # Deterministic init mimicking PyTorch's U(-1/sqrt(H), 1/sqrt(H)).
    k = 1.0 / np.sqrt(hidden_size)
    keys = jax.random.split(key, 6)
    w_ih = jax.random.uniform(keys[0], (4 * hidden_size, input_size), jnp.float32, -k, k)
    w_hh = jax.random.uniform(keys[1], (4 * hidden_size, hidden_size), jnp.float32, -k, k)
    b_ih = jax.random.uniform(keys[2], (4 * hidden_size,), jnp.float32, -k, k)
    b_hh = jax.random.uniform(keys[3], (4 * hidden_size,), jnp.float32, -k, k)
    w_fc = jax.random.uniform(keys[4], (output_size, hidden_size), jnp.float32, -k, k)
    b_fc = jax.random.uniform(keys[5], (output_size,), jnp.float32, -k, k)
    return (w_ih, w_hh, b_ih, b_hh, w_fc, b_fc)


if __name__ == "__main__":
    batch, seq = 2, 8
    input_size, hidden_size, output_size = 1, 100, 6   # matches the module spec

    key = jax.random.PRNGKey(0)
    kx, kp = jax.random.split(key)
    x = jax.random.normal(kx, (batch, seq), jnp.float32)   # module unsqueezes to (B, T, 1)
    params = init_params(kp, input_size, hidden_size, output_size)

    packed = prepare_params(params)                         # one-time layout work
    out = jax.block_until_ready(lstm_net_forward(x, packed))
    ref = jax.block_until_ready(reference_forward(x, params))

    assert out.shape == (batch, output_size)
    assert np.allclose(np.asarray(out), np.asarray(ref), rtol=1e-4, atol=1e-4)
    print("KERNEL_OK")
</pallas_src>

<mosaic_0001>
module attributes {stable_mosaic.version = 11 : i64} {
  func.func @lstm_kernel(%arg0: memref<8x8x1xf32, #tpu.memory_space<vmem>>, %arg1: memref<1x512xf32, #tpu.memory_space<vmem>>, %arg2: memref<128x512xf32, #tpu.memory_space<vmem>>, %arg3: memref<1x512xf32, #tpu.memory_space<vmem>>, %arg4: memref<128x128xf32, #tpu.memory_space<vmem>>, %arg5: memref<1x128xf32, #tpu.memory_space<vmem>>, %arg6: memref<8x128xf32, #tpu.memory_space<vmem>>) attributes {dimension_semantics = [], scalar_prefetch = 0 : i64, scratch_operands = 0 : i64, tpu.core_type = #tpu.core_type<tc>} {
    %c0 = arith.constant 0 : index
    %c0_0 = arith.constant 0 : index
    %0 = vector.load %arg1[%c0, %c0_0] : memref<1x512xf32, #tpu.memory_space<vmem>>, vector<1x512xf32>
    %c0_1 = arith.constant 0 : index
    %c0_2 = arith.constant 0 : index
    %1 = vector.load %arg3[%c0_1, %c0_2] : memref<1x512xf32, #tpu.memory_space<vmem>>, vector<1x512xf32>
    %cst = arith.constant 0.000000e+00 : f32
    %2 = vector.broadcast %cst : f32 to vector<8x128xf32>
    %c0_3 = arith.constant 0 : index
    %c0_4 = arith.constant 0 : index
    %c0_5 = arith.constant 0 : index
    %3 = vector.load %arg0[%c0_3, %c0_4, %c0_5] : memref<8x8x1xf32, #tpu.memory_space<vmem>>, vector<1x8x1xf32>
    %4 = vector.shape_cast %3 : vector<1x8x1xf32> to vector<8x1xf32>
    %5 = vector.broadcast %4 : vector<8x1xf32> to vector<8x512xf32>
    %6 = vector.broadcast %0 : vector<1x512xf32> to vector<8x512xf32>
    %7 = arith.mulf %5, %6 : vector<8x512xf32>
    %8 = vector.broadcast %1 : vector<1x512xf32> to vector<8x512xf32>
    %9 = arith.addf %7, %8 : vector<8x512xf32>
    %10 = vector.extract_strided_slice %9 {offsets = [0, 0], sizes = [8, 128], strides = [1, 1]} : vector<8x512xf32> to vector<8x128xf32>
    %cst_6 = arith.constant 5.000000e-01 : f32
    %11 = vector.broadcast %cst_6 : f32 to vector<8x128xf32>
    %12 = arith.mulf %11, %10 : vector<8x128xf32>
    %13 = math.tanh %12 : vector<8x128xf32>
    %cst_7 = arith.constant 5.000000e-01 : f32
    %14 = vector.broadcast %cst_7 : f32 to vector<8x128xf32>
    %15 = arith.mulf %14, %13 : vector<8x128xf32>
    %cst_8 = arith.constant 5.000000e-01 : f32
    %16 = vector.broadcast %cst_8 : f32 to vector<8x128xf32>
    %17 = arith.addf %15, %16 : vector<8x128xf32>
    %18 = vector.extract_strided_slice %9 {offsets = [0, 128], sizes = [8, 128], strides = [1, 1]} : vector<8x512xf32> to vector<8x128xf32>
    %cst_9 = arith.constant 5.000000e-01 : f32
    %19 = vector.broadcast %cst_9 : f32 to vector<8x128xf32>
    %20 = arith.mulf %19, %18 : vector<8x128xf32>
    %21 = math.tanh %20 : vector<8x128xf32>
    %cst_10 = arith.constant 5.000000e-01 : f32
    %22 = vector.broadcast %cst_10 : f32 to vector<8x128xf32>
    %23 = arith.mulf %22, %21 : vector<8x128xf32>
    %cst_11 = arith.constant 5.000000e-01 : f32
    %24 = vector.broadcast %cst_11 : f32 to vector<8x128xf32>
    %25 = arith.addf %23, %24 : vector<8x128xf32>
    %26 = vector.extract_strided_slice %9 {offsets = [0, 256], sizes = [8, 128], strides = [1, 1]} : vector<8x512xf32> to vector<8x128xf32>
    %27 = math.tanh %26 : vector<8x128xf32>
    %28 = vector.extract_strided_slice %9 {offsets = [0, 384], sizes = [8, 128], strides = [1, 1]} : vector<8x512xf32> to vector<8x128xf32>
    %cst_12 = arith.constant 5.000000e-01 : f32
    %29 = vector.broadcast %cst_12 : f32 to vector<8x128xf32>
    %30 = arith.mulf %29, %28 : vector<8x128xf32>
    %31 = math.tanh %30 : vector<8x128xf32>
    %cst_13 = arith.constant 5.000000e-01 : f32
    %32 = vector.broadcast %cst_13 : f32 to vector<8x128xf32>
    %33 = arith.mulf %32, %31 : vector<8x128xf32>
    %cst_14 = arith.constant 5.000000e-01 : f32
    %34 = vector.broadcast %cst_14 : f32 to vector<8x128xf32>
    %35 = arith.addf %33, %34 : vector<8x128xf32>
    %36 = arith.mulf %25, %2 : vector<8x128xf32>
    %37 = arith.mulf %17, %27 : vector<8x128xf32>
    %38 = arith.addf %36, %37 : vector<8x128xf32>
    %39 = math.tanh %38 : vector<8x128xf32>
    %40 = arith.mulf %35, %39 : vector<8x128xf32>
    %c1 = arith.constant 1 : index
    %c0_15 = arith.constant 0 : index
    %c0_16 = arith.constant 0 : index
    %41 = vector.load %arg0[%c1, %c0_15, %c0_16] : memref<8x8x1xf32, #tpu.memory_space<vmem>>, vector<1x8x1xf32>
    %42 = vector.shape_cast %41 : vector<1x8x1xf32> to vector<8x1xf32>
    %43 = vector.broadcast %42 : vector<8x1xf32> to vector<8x512xf32>
    %44 = vector.broadcast %0 : vector<1x512xf32> to vector<8x512xf32>
    %45 = arith.mulf %43, %44 : vector<8x512xf32>
    %46 = vector.broadcast %1 : vector<1x512xf32> to vector<8x512xf32>
    %47 = arith.addf %45, %46 : vector<8x512xf32>
    %c0_17 = arith.constant 0 : index
    %c0_18 = arith.constant 0 : index
    %48 = vector.load %arg2[%c0_17, %c0_18] : memref<128x512xf32, #tpu.memory_space<vmem>>, vector<128x512xf32>
    %cst_19 = arith.constant dense<0.000000e+00> : vector<8x512xf32>
    %49 = tpu.matmul %40, %48, %cst_19 {dimension_numbers = #tpu.dot_dimension_numbers<[1], [0], [0], [1], [0, 0, 1, 1], [], []>} : vector<8x128xf32>, vector<128x512xf32>, vector<8x512xf32> -> vector<8x512xf32>
    %50 = arith.addf %47, %49 : vector<8x512xf32>
    %51 = vector.extract_strided_slice %50 {offsets = [0, 0], sizes = [8, 128], strides = [1, 1]} : vector<8x512xf32> to vector<8x128xf32>
    %cst_20 = arith.constant 5.000000e-01 : f32
    %52 = vector.broadcast %cst_20 : f32 to vector<8x128xf32>
    %53 = arith.mulf %52, %51 : vector<8x128xf32>
    %54 = math.tanh %53 : vector<8x128xf32>
    %cst_21 = arith.constant 5.000000e-01 : f32
    %55 = vector.broadcast %cst_21 : f32 to vector<8x128xf32>
    %56 = arith.mulf %55, %54 : vector<8x128xf32>
    %cst_22 = arith.constant 5.000000e-01 : f32
    %57 = vector.broadcast %cst_22 : f32 to vector<8x128xf32>
    %58 = arith.addf %56, %57 : vector<8x128xf32>
    %59 = vector.extract_strided_slice %50 {offsets = [0, 128], sizes = [8, 128], strides = [1, 1]} : vector<8x512xf32> to vector<8x128xf32>
    %cst_23 = arith.constant 5.000000e-01 : f32
    %60 = vector.broadcast %cst_23 : f32 to vector<8x128xf32>
    %61 = arith.mulf %60, %59 : vector<8x128xf32>
    %62 = math.tanh %61 : vector<8x128xf32>
    %cst_24 = arith.constant 5.000000e-01 : f32
    %63 = vector.broadcast %cst_24 : f32 to vector<8x128xf32>
    %64 = arith.mulf %63, %62 : vector<8x128xf32>
    %cst_25 = arith.constant 5.000000e-01 : f32
    %65 = vector.broadcast %cst_25 : f32 to vector<8x128xf32>
    %66 = arith.addf %64, %65 : vector<8x128xf32>
    %67 = vector.extract_strided_slice %50 {offsets = [0, 256], sizes = [8, 128], strides = [1, 1]} : vector<8x512xf32> to vector<8x128xf32>
    %68 = math.tanh %67 : vector<8x128xf32>
    %69 = vector.extract_strided_slice %50 {offsets = [0, 384], sizes = [8, 128], strides = [1, 1]} : vector<8x512xf32> to vector<8x128xf32>
    %cst_26 = arith.constant 5.000000e-01 : f32
    %70 = vector.broadcast %cst_26 : f32 to vector<8x128xf32>
    %71 = arith.mulf %70, %69 : vector<8x128xf32>
    %72 = math.tanh %71 : vector<8x128xf32>
    %cst_27 = arith.constant 5.000000e-01 : f32
    %73 = vector.broadcast %cst_27 : f32 to vector<8x128xf32>
    %74 = arith.mulf %73, %72 : vector<8x128xf32>
    %cst_28 = arith.constant 5.000000e-01 : f32
    %75 = vector.broadcast %cst_28 : f32 to vector<8x128xf32>
    %76 = arith.addf %74, %75 : vector<8x128xf32>
    %77 = arith.mulf %66, %38 : vector<8x128xf32>
    %78 = arith.mulf %58, %68 : vector<8x128xf32>
    %79 = arith.addf %77, %78 : vector<8x128xf32>
    %80 = math.tanh %79 : vector<8x128xf32>
    %81 = arith.mulf %76, %80 : vector<8x128xf32>
    %c2 = arith.constant 2 : index
    %c0_29 = arith.constant 0 : index
    %c0_30 = arith.constant 0 : index
    %82 = vector.load %arg0[%c2, %c0_29, %c0_30] : memref<8x8x1xf32, #tpu.memory_space<vmem>>, vector<1x8x1xf32>
    %83 = vector.shape_cast %82 : vector<1x8x1xf32> to vector<8x1xf32>
    %84 = vector.broadcast %83 : vector<8x1xf32> to vector<8x512xf32>
    %85 = vector.broadcast %0 : vector<1x512xf32> to vector<8x512xf32>
    %86 = arith.mulf %84, %85 : vector<8x512xf32>
    %87 = vector.broadcast %1 : vector<1x512xf32> to vector<8x512xf32>
    %88 = arith.addf %86, %87 : vector<8x512xf32>
    %c0_31 = arith.constant 0 : index
    %c0_32 = arith.constant 0 : index
    %89 = vector.load %arg2[%c0_31, %c0_32] : memref<128x512xf32, #tpu.memory_space<vmem>>, vector<128x512xf32>
    %cst_33 = arith.constant dense<0.000000e+00> : vector<8x512xf32>
    %90 = tpu.matmul %81, %89, %cst_33 {dimension_numbers = #tpu.dot_dimension_numbers<[1], [0], [0], [1], [0, 0, 1, 1], [], []>} : vector<8x128xf32>, vector<128x512xf32>, vector<8x512xf32> -> vector<8x512xf32>
    %91 = arith.addf %88, %90 : vector<8x512xf32>
    %92 = vector.extract_strided_slice %91 {offsets = [0, 0], sizes = [8, 128], strides = [1, 1]} : vector<8x512xf32> to vector<8x128xf32>
    %cst_34 = arith.constant 5.000000e-01 : f32
    %93 = vector.broadcast %cst_34 : f32 to vector<8x128xf32>
    %94 = arith.mulf %93, %92 : vector<8x128xf32>
    %95 = math.tanh %94 : vector<8x128xf32>
    %cst_35 = arith.constant 5.000000e-01 : f32
    %96 = vector.broadcast %cst_35 : f32 to vector<8x128xf32>
    %97 = arith.mulf %96, %95 : vector<8x128xf32>
    %cst_36 = arith.constant 5.000000e-01 : f32
    %98 = vector.broadcast %cst_36 : f32 to vector<8x128xf32>
    %99 = arith.addf %97, %98 : vector<8x128xf32>
    %100 = vector.extract_strided_slice %91 {offsets = [0, 128], sizes = [8, 128], strides = [1, 1]} : vector<8x512xf32> to vector<8x128xf32>
    %cst_37 = arith.constant 5.000000e-01 : f32
    %101 = vector.broadcast %cst_37 : f32 to vector<8x128xf32>
    %102 = arith.mulf %101, %100 : vector<8x128xf32>
    %103 = math.tanh %102 : vector<8x128xf32>
    %cst_38 = arith.constant 5.000000e-01 : f32
    %104 = vector.broadcast %cst_38 : f32 to vector<8x128xf32>
    %105 = arith.mulf %104, %103 : vector<8x128xf32>
    %cst_39 = arith.constant 5.000000e-01 : f32
    %106 = vector.broadcast %cst_39 : f32 to vector<8x128xf32>
    %107 = arith.addf %105, %106 : vector<8x128xf32>
    %108 = vector.extract_strided_slice %91 {offsets = [0, 256], sizes = [8, 128], strides = [1, 1]} : vector<8x512xf32> to vector<8x128xf32>
    %109 = math.tanh %108 : vector<8x128xf32>
    %110 = vector.extract_strided_slice %91 {offsets = [0, 384], sizes = [8, 128], strides = [1, 1]} : vector<8x512xf32> to vector<8x128xf32>
    %cst_40 = arith.constant 5.000000e-01 : f32
    %111 = vector.broadcast %cst_40 : f32 to vector<8x128xf32>
    %112 = arith.mulf %111, %110 : vector<8x128xf32>
    %113 = math.tanh %112 : vector<8x128xf32>
    %cst_41 = arith.constant 5.000000e-01 : f32
    %114 = vector.broadcast %cst_41 : f32 to vector<8x128xf32>
    %115 = arith.mulf %114, %113 : vector<8x128xf32>
    %cst_42 = arith.constant 5.000000e-01 : f32
    %116 = vector.broadcast %cst_42 : f32 to vector<8x128xf32>
    %117 = arith.addf %115, %116 : vector<8x128xf32>
    %118 = arith.mulf %107, %79 : vector<8x128xf32>
    %119 = arith.mulf %99, %109 : vector<8x128xf32>
    %120 = arith.addf %118, %119 : vector<8x128xf32>
    %121 = math.tanh %120 : vector<8x128xf32>
    %122 = arith.mulf %117, %121 : vector<8x128xf32>
    %c3 = arith.constant 3 : index
    %c0_43 = arith.constant 0 : index
    %c0_44 = arith.constant 0 : index
    %123 = vector.load %arg0[%c3, %c0_43, %c0_44] : memref<8x8x1xf32, #tpu.memory_space<vmem>>, vector<1x8x1xf32>
    %124 = vector.shape_cast %123 : vector<1x8x1xf32> to vector<8x1xf32>
    %125 = vector.broadcast %124 : vector<8x1xf32> to vector<8x512xf32>
    %126 = vector.broadcast %0 : vector<1x512xf32> to vector<8x512xf32>
    %127 = arith.mulf %125, %126 : vector<8x512xf32>
    %128 = vector.broadcast %1 : vector<1x512xf32> to vector<8x512xf32>
    %129 = arith.addf %127, %128 : vector<8x512xf32>
    %c0_45 = arith.constant 0 : index
    %c0_46 = arith.constant 0 : index
    %130 = vector.load %arg2[%c0_45, %c0_46] : memref<128x512xf32, #tpu.memory_space<vmem>>, vector<128x512xf32>
    %cst_47 = arith.constant dense<0.000000e+00> : vector<8x512xf32>
    %131 = tpu.matmul %122, %130, %cst_47 {dimension_numbers = #tpu.dot_dimension_numbers<[1], [0], [0], [1], [0, 0, 1, 1], [], []>} : vector<8x128xf32>, vector<128x512xf32>, vector<8x512xf32> -> vector<8x512xf32>
    %132 = arith.addf %129, %131 : vector<8x512xf32>
    %133 = vector.extract_strided_slice %132 {offsets = [0, 0], sizes = [8, 128], strides = [1, 1]} : vector<8x512xf32> to vector<8x128xf32>
    %cst_48 = arith.constant 5.000000e-01 : f32
    %134 = vector.broadcast %cst_48 : f32 to vector<8x128xf32>
    %135 = arith.mulf %134, %133 : vector<8x128xf32>
    %136 = math.tanh %135 : vector<8x128xf32>
    %cst_49 = arith.constant 5.000000e-01 : f32
    %137 = vector.broadcast %cst_49 : f32 to vector<8x128xf32>
    %138 = arith.mulf %137, %136 : vector<8x128xf32>
    %cst_50 = arith.constant 5.000000e-01 : f32
    %139 = vector.broadcast %cst_50 : f32 to vector<8x128xf32>
    %140 = arith.addf %138, %139 : vector<8x128xf32>
    %141 = vector.extract_strided_slice %132 {offsets = [0, 128], sizes = [8, 128], strides = [1, 1]} : vector<8x512xf32> to vector<8x128xf32>
    %cst_51 = arith.constant 5.000000e-01 : f32
    %142 = vector.broadcast %cst_51 : f32 to vector<8x128xf32>
    %143 = arith.mulf %142, %141 : vector<8x128xf32>
    %144 = math.tanh %143 : vector<8x128xf32>
    %cst_52 = arith.constant 5.000000e-01 : f32
    %145 = vector.broadcast %cst_52 : f32 to vector<8x128xf32>
    %146 = arith.mulf %145, %144 : vector<8x128xf32>
    %cst_53 = arith.constant 5.000000e-01 : f32
    %147 = vector.broadcast %cst_53 : f32 to vector<8x128xf32>
    %148 = arith.addf %146, %147 : vector<8x128xf32>
    %149 = vector.extract_strided_slice %132 {offsets = [0, 256], sizes = [8, 128], strides = [1, 1]} : vector<8x512xf32> to vector<8x128xf32>
    %150 = math.tanh %149 : vector<8x128xf32>
    %151 = vector.extract_strided_slice %132 {offsets = [0, 384], sizes = [8, 128], strides = [1, 1]} : vector<8x512xf32> to vector<8x128xf32>
    %cst_54 = arith.constant 5.000000e-01 : f32
    %152 = vector.broadcast %cst_54 : f32 to vector<8x128xf32>
    %153 = arith.mulf %152, %151 : vector<8x128xf32>
    %154 = math.tanh %153 : vector<8x128xf32>
    %cst_55 = arith.constant 5.000000e-01 : f32
    %155 = vector.broadcast %cst_55 : f32 to vector<8x128xf32>
    %156 = arith.mulf %155, %154 : vector<8x128xf32>
    %cst_56 = arith.constant 5.000000e-01 : f32
    %157 = vector.broadcast %cst_56 : f32 to vector<8x128xf32>
    %158 = arith.addf %156, %157 : vector<8x128xf32>
    %159 = arith.mulf %148, %120 : vector<8x128xf32>
    %160 = arith.mulf %140, %150 : vector<8x128xf32>
    %161 = arith.addf %159, %160 : vector<8x128xf32>
    %162 = math.tanh %161 : vector<8x128xf32>
    %163 = arith.mulf %158, %162 : vector<8x128xf32>
    %c4 = arith.constant 4 : index
    %c0_57 = arith.constant 0 : index
    %c0_58 = arith.constant 0 : index
    %164 = vector.load %arg0[%c4, %c0_57, %c0_58] : memref<8x8x1xf32, #tpu.memory_space<vmem>>, vector<1x8x1xf32>
    %165 = vector.shape_cast %164 : vector<1x8x1xf32> to vector<8x1xf32>
    %166 = vector.broadcast %165 : vector<8x1xf32> to vector<8x512xf32>
    %167 = vector.broadcast %0 : vector<1x512xf32> to vector<8x512xf32>
    %168 = arith.mulf %166, %167 : vector<8x512xf32>
    %169 = vector.broadcast %1 : vector<1x512xf32> to vector<8x512xf32>
    %170 = arith.addf %168, %169 : vector<8x512xf32>
    %c0_59 = arith.constant 0 : index
    %c0_60 = arith.constant 0 : index
    %171 = vector.load %arg2[%c0_59, %c0_60] : memref<128x512xf32, #tpu.memory_space<vmem>>, vector<128x512xf32>
    %cst_61 = arith.constant dense<0.000000e+00> : vector<8x512xf32>
    %172 = tpu.matmul %163, %171, %cst_61 {dimension_numbers = #tpu.dot_dimension_numbers<[1], [0], [0], [1], [0, 0, 1, 1], [], []>} : vector<8x128xf32>, vector<128x512xf32>, vector<8x512xf32> -> vector<8x512xf32>
    %173 = arith.addf %170, %172 : vector<8x512xf32>
    %174 = vector.extract_strided_slice %173 {offsets = [0, 0], sizes = [8, 128], strides = [1, 1]} : vector<8x512xf32> to vector<8x128xf32>
    %cst_62 = arith.constant 5.000000e-01 : f32
    %175 = vector.broadcast %cst_62 : f32 to vector<8x128xf32>
    %176 = arith.mulf %175, %174 : vector<8x128xf32>
    %177 = math.tanh %176 : vector<8x128xf32>
    %cst_63 = arith.constant 5.000000e-01 : f32
    %178 = vector.broadcast %cst_63 : f32 to vector<8x128xf32>
    %179 = arith.mulf %178, %177 : vector<8x128xf32>
    %cst_64 = arith.constant 5.000000e-01 : f32
    %180 = vector.broadcast %cst_64 : f32 to vector<8x128xf32>
    %181 = arith.addf %179, %180 : vector<8x128xf32>
    %182 = vector.extract_strided_slice %173 {offsets = [0, 128], sizes = [8, 128], strides = [1, 1]} : vector<8x512xf32> to vector<8x128xf32>
    %cst_65 = arith.constant 5.000000e-01 : f32
    %183 = vector.broadcast %cst_65 : f32 to vector<8x128xf32>
    %184 = arith.mulf %183, %182 : vector<8x128xf32>
    %185 = math.tanh %184 : vector<8x128xf32>
    %cst_66 = arith.constant 5.000000e-01 : f32
    %186 = vector.broadcast %cst_66 : f32 to vector<8x128xf32>
    %187 = arith.mulf %186, %185 : vector<8x128xf32>
    %cst_67 = arith.constant 5.000000e-01 : f32
    %188 = vector.broadcast %cst_67 : f32 to vector<8x128xf32>
    %189 = arith.addf %187, %188 : vector<8x128xf32>
    %190 = vector.extract_strided_slice %173 {offsets = [0, 256], sizes = [8, 128], strides = [1, 1]} : vector<8x512xf32> to vector<8x128xf32>
    %191 = math.tanh %190 : vector<8x128xf32>
    %192 = vector.extract_strided_slice %173 {offsets = [0, 384], sizes = [8, 128], strides = [1, 1]} : vector<8x512xf32> to vector<8x128xf32>
    %cst_68 = arith.constant 5.000000e-01 : f32
    %193 = vector.broadcast %cst_68 : f32 to vector<8x128xf32>
    %194 = arith.mulf %193, %192 : vector<8x128xf32>
    %195 = math.tanh %194 : vector<8x128xf32>
    %cst_69 = arith.constant 5.000000e-01 : f32
    %196 = vector.broadcast %cst_69 : f32 to vector<8x128xf32>
    %197 = arith.mulf %196, %195 : vector<8x128xf32>
    %cst_70 = arith.constant 5.000000e-01 : f32
    %198 = vector.broadcast %cst_70 : f32 to vector<8x128xf32>
    %199 = arith.addf %197, %198 : vector<8x128xf32>
    %200 = arith.mulf %189, %161 : vector<8x128xf32>
    %201 = arith.mulf %181, %191 : vector<8x128xf32>
    %202 = arith.addf %200, %201 : vector<8x128xf32>
    %203 = math.tanh %202 : vector<8x128xf32>
    %204 = arith.mulf %199, %203 : vector<8x128xf32>
    %c5 = arith.constant 5 : index
    %c0_71 = arith.constant 0 : index
    %c0_72 = arith.constant 0 : index
    %205 = vector.load %arg0[%c5, %c0_71, %c0_72] : memref<8x8x1xf32, #tpu.memory_space<vmem>>, vector<1x8x1xf32>
    %206 = vector.shape_cast %205 : vector<1x8x1xf32> to vector<8x1xf32>
    %207 = vector.broadcast %206 : vector<8x1xf32> to vector<8x512xf32>
    %208 = vector.broadcast %0 : vector<1x512xf32> to vector<8x512xf32>
    %209 = arith.mulf %207, %208 : vector<8x512xf32>
    %210 = vector.broadcast %1 : vector<1x512xf32> to vector<8x512xf32>
    %211 = arith.addf %209, %210 : vector<8x512xf32>
    %c0_73 = arith.constant 0 : index
    %c0_74 = arith.constant 0 : index
    %212 = vector.load %arg2[%c0_73, %c0_74] : memref<128x512xf32, #tpu.memory_space<vmem>>, vector<128x512xf32>
    %cst_75 = arith.constant dense<0.000000e+00> : vector<8x512xf32>
    %213 = tpu.matmul %204, %212, %cst_75 {dimension_numbers = #tpu.dot_dimension_numbers<[1], [0], [0], [1], [0, 0, 1, 1], [], []>} : vector<8x128xf32>, vector<128x512xf32>, vector<8x512xf32> -> vector<8x512xf32>
    %214 = arith.addf %211, %213 : vector<8x512xf32>
    %215 = vector.extract_strided_slice %214 {offsets = [0, 0], sizes = [8, 128], strides = [1, 1]} : vector<8x512xf32> to vector<8x128xf32>
    %cst_76 = arith.constant 5.000000e-01 : f32
    %216 = vector.broadcast %cst_76 : f32 to vector<8x128xf32>
    %217 = arith.mulf %216, %215 : vector<8x128xf32>
    %218 = math.tanh %217 : vector<8x128xf32>
    %cst_77 = arith.constant 5.000000e-01 : f32
    %219 = vector.broadcast %cst_77 : f32 to vector<8x128xf32>
    %220 = arith.mulf %219, %218 : vector<8x128xf32>
    %cst_78 = arith.constant 5.000000e-01 : f32
    %221 = vector.broadcast %cst_78 : f32 to vector<8x128xf32>
    %222 = arith.addf %220, %221 : vector<8x128xf32>
    %223 = vector.extract_strided_slice %214 {offsets = [0, 128], sizes = [8, 128], strides = [1, 1]} : vector<8x512xf32> to vector<8x128xf32>
    %cst_79 = arith.constant 5.000000e-01 : f32
    %224 = vector.broadcast %cst_79 : f32 to vector<8x128xf32>
    %225 = arith.mulf %224, %223 : vector<8x128xf32>
    %226 = math.tanh %225 : vector<8x128xf32>
    %cst_80 = arith.constant 5.000000e-01 : f32
    %227 = vector.broadcast %cst_80 : f32 to vector<8x128xf32>
    %228 = arith.mulf %227, %226 : vector<8x128xf32>
    %cst_81 = arith.constant 5.000000e-01 : f32
    %229 = vector.broadcast %cst_81 : f32 to vector<8x128xf32>
    %230 = arith.addf %228, %229 : vector<8x128xf32>
    %231 = vector.extract_strided_slice %214 {offsets = [0, 256], sizes = [8, 128], strides = [1, 1]} : vector<8x512xf32> to vector<8x128xf32>
    %232 = math.tanh %231 : vector<8x128xf32>
    %233 = vector.extract_strided_slice %214 {offsets = [0, 384], sizes = [8, 128], strides = [1, 1]} : vector<8x512xf32> to vector<8x128xf32>
    %cst_82 = arith.constant 5.000000e-01 : f32
    %234 = vector.broadcast %cst_82 : f32 to vector<8x128xf32>
    %235 = arith.mulf %234, %233 : vector<8x128xf32>
    %236 = math.tanh %235 : vector<8x128xf32>
    %cst_83 = arith.constant 5.000000e-01 : f32
    %237 = vector.broadcast %cst_83 : f32 to vector<8x128xf32>
    %238 = arith.mulf %237, %236 : vector<8x128xf32>
    %cst_84 = arith.constant 5.000000e-01 : f32
    %239 = vector.broadcast %cst_84 : f32 to vector<8x128xf32>
    %240 = arith.addf %238, %239 : vector<8x128xf32>
    %241 = arith.mulf %230, %202 : vector<8x128xf32>
    %242 = arith.mulf %222, %232 : vector<8x128xf32>
    %243 = arith.addf %241, %242 : vector<8x128xf32>
    %244 = math.tanh %243 : vector<8x128xf32>
    %245 = arith.mulf %240, %244 : vector<8x128xf32>
    %c6 = arith.constant 6 : index
    %c0_85 = arith.constant 0 : index
    %c0_86 = arith.constant 0 : index
    %246 = vector.load %arg0[%c6, %c0_85, %c0_86] : memref<8x8x1xf32, #tpu.memory_space<vmem>>, vector<1x8x1xf32>
    %247 = vector.shape_cast %246 : vector<1x8x1xf32> to vector<8x1xf32>
    %248 = vector.broadcast %247 : vector<8x1xf32> to vector<8x512xf32>
    %249 = vector.broadcast %0 : vector<1x512xf32> to vector<8x512xf32>
    %250 = arith.mulf %248, %249 : vector<8x512xf32>
    %251 = vector.broadcast %1 : vector<1x512xf32> to vector<8x512xf32>
    %252 = arith.addf %250, %251 : vector<8x512xf32>
    %c0_87 = arith.constant 0 : index
    %c0_88 = arith.constant 0 : index
    %253 = vector.load %arg2[%c0_87, %c0_88] : memref<128x512xf32, #tpu.memory_space<vmem>>, vector<128x512xf32>
    %cst_89 = arith.constant dense<0.000000e+00> : vector<8x512xf32>
    %254 = tpu.matmul %245, %253, %cst_89 {dimension_numbers = #tpu.dot_dimension_numbers<[1], [0], [0], [1], [0, 0, 1, 1], [], []>} : vector<8x128xf32>, vector<128x512xf32>, vector<8x512xf32> -> vector<8x512xf32>
    %255 = arith.addf %252, %254 : vector<8x512xf32>
    %256 = vector.extract_strided_slice %255 {offsets = [0, 0], sizes = [8, 128], strides = [1, 1]} : vector<8x512xf32> to vector<8x128xf32>
    %cst_90 = arith.constant 5.000000e-01 : f32
    %257 = vector.broadcast %cst_90 : f32 to vector<8x128xf32>
    %258 = arith.mulf %257, %256 : vector<8x128xf32>
    %259 = math.tanh %258 : vector<8x128xf32>
    %cst_91 = arith.constant 5.000000e-01 : f32
    %260 = vector.broadcast %cst_91 : f32 to vector<8x128xf32>
    %261 = arith.mulf %260, %259 : vector<8x128xf32>
    %cst_92 = arith.constant 5.000000e-01 : f32
    %262 = vector.broadcast %cst_92 : f32 to vector<8x128xf32>
    %263 = arith.addf %261, %262 : vector<8x128xf32>
    %264 = vector.extract_strided_slice %255 {offsets = [0, 128], sizes = [8, 128], strides = [1, 1]} : vector<8x512xf32> to vector<8x128xf32>
    %cst_93 = arith.constant 5.000000e-01 : f32
    %265 = vector.broadcast %cst_93 : f32 to vector<8x128xf32>
    %266 = arith.mulf %265, %264 : vector<8x128xf32>
    %267 = math.tanh %266 : vector<8x128xf32>
    %cst_94 = arith.constant 5.000000e-01 : f32
    %268 = vector.broadcast %cst_94 : f32 to vector<8x128xf32>
    %269 = arith.mulf %268, %267 : vector<8x128xf32>
    %cst_95 = arith.constant 5.000000e-01 : f32
    %270 = vector.broadcast %cst_95 : f32 to vector<8x128xf32>
    %271 = arith.addf %269, %270 : vector<8x128xf32>
    %272 = vector.extract_strided_slice %255 {offsets = [0, 256], sizes = [8, 128], strides = [1, 1]} : vector<8x512xf32> to vector<8x128xf32>
    %273 = math.tanh %272 : vector<8x128xf32>
    %274 = vector.extract_strided_slice %255 {offsets = [0, 384], sizes = [8, 128], strides = [1, 1]} : vector<8x512xf32> to vector<8x128xf32>
    %cst_96 = arith.constant 5.000000e-01 : f32
    %275 = vector.broadcast %cst_96 : f32 to vector<8x128xf32>
    %276 = arith.mulf %275, %274 : vector<8x128xf32>
    %277 = math.tanh %276 : vector<8x128xf32>
    %cst_97 = arith.constant 5.000000e-01 : f32
    %278 = vector.broadcast %cst_97 : f32 to vector<8x128xf32>
    %279 = arith.mulf %278, %277 : vector<8x128xf32>
    %cst_98 = arith.constant 5.000000e-01 : f32
    %280 = vector.broadcast %cst_98 : f32 to vector<8x128xf32>
    %281 = arith.addf %279, %280 : vector<8x128xf32>
    %282 = arith.mulf %271, %243 : vector<8x128xf32>
    %283 = arith.mulf %263, %273 : vector<8x128xf32>
    %284 = arith.addf %282, %283 : vector<8x128xf32>
    %285 = math.tanh %284 : vector<8x128xf32>
    %286 = arith.mulf %281, %285 : vector<8x128xf32>
    %c7 = arith.constant 7 : index
    %c0_99 = arith.constant 0 : index
    %c0_100 = arith.constant 0 : index
    %287 = vector.load %arg0[%c7, %c0_99, %c0_100] : memref<8x8x1xf32, #tpu.memory_space<vmem>>, vector<1x8x1xf32>
    %288 = vector.shape_cast %287 : vector<1x8x1xf32> to vector<8x1xf32>
    %289 = vector.broadcast %288 : vector<8x1xf32> to vector<8x512xf32>
    %290 = vector.broadcast %0 : vector<1x512xf32> to vector<8x512xf32>
    %291 = arith.mulf %289, %290 : vector<8x512xf32>
    %292 = vector.broadcast %1 : vector<1x512xf32> to vector<8x512xf32>
    %293 = arith.addf %291, %292 : vector<8x512xf32>
    %c0_101 = arith.constant 0 : index
    %c0_102 = arith.constant 0 : index
    %294 = vector.load %arg2[%c0_101, %c0_102] : memref<128x512xf32, #tpu.memory_space<vmem>>, vector<128x512xf32>
    %cst_103 = arith.constant dense<0.000000e+00> : vector<8x512xf32>
    %295 = tpu.matmul %286, %294, %cst_103 {dimension_numbers = #tpu.dot_dimension_numbers<[1], [0], [0], [1], [0, 0, 1, 1], [], []>} : vector<8x128xf32>, vector<128x512xf32>, vector<8x512xf32> -> vector<8x512xf32>
    %296 = arith.addf %293, %295 : vector<8x512xf32>
    %297 = vector.extract_strided_slice %296 {offsets = [0, 0], sizes = [8, 128], strides = [1, 1]} : vector<8x512xf32> to vector<8x128xf32>
    %cst_104 = arith.constant 5.000000e-01 : f32
    %298 = vector.broadcast %cst_104 : f32 to vector<8x128xf32>
    %299 = arith.mulf %298, %297 : vector<8x128xf32>
    %300 = math.tanh %299 : vector<8x128xf32>
    %cst_105 = arith.constant 5.000000e-01 : f32
    %301 = vector.broadcast %cst_105 : f32 to vector<8x128xf32>
    %302 = arith.mulf %301, %300 : vector<8x128xf32>
    %cst_106 = arith.constant 5.000000e-01 : f32
    %303 = vector.broadcast %cst_106 : f32 to vector<8x128xf32>
    %304 = arith.addf %302, %303 : vector<8x128xf32>
    %305 = vector.extract_strided_slice %296 {offsets = [0, 128], sizes = [8, 128], strides = [1, 1]} : vector<8x512xf32> to vector<8x128xf32>
    %cst_107 = arith.constant 5.000000e-01 : f32
    %306 = vector.broadcast %cst_107 : f32 to vector<8x128xf32>
    %307 = arith.mulf %306, %305 : vector<8x128xf32>
    %308 = math.tanh %307 : vector<8x128xf32>
    %cst_108 = arith.constant 5.000000e-01 : f32
    %309 = vector.broadcast %cst_108 : f32 to vector<8x128xf32>
    %310 = arith.mulf %309, %308 : vector<8x128xf32>
    %cst_109 = arith.constant 5.000000e-01 : f32
    %311 = vector.broadcast %cst_109 : f32 to vector<8x128xf32>
    %312 = arith.addf %310, %311 : vector<8x128xf32>
    %313 = vector.extract_strided_slice %296 {offsets = [0, 256], sizes = [8, 128], strides = [1, 1]} : vector<8x512xf32> to vector<8x128xf32>
    %314 = math.tanh %313 : vector<8x128xf32>
    %315 = vector.extract_strided_slice %296 {offsets = [0, 384], sizes = [8, 128], strides = [1, 1]} : vector<8x512xf32> to vector<8x128xf32>
    %cst_110 = arith.constant 5.000000e-01 : f32
    %316 = vector.broadcast %cst_110 : f32 to vector<8x128xf32>
    %317 = arith.mulf %316, %315 : vector<8x128xf32>
    %318 = math.tanh %317 : vector<8x128xf32>
    %cst_111 = arith.constant 5.000000e-01 : f32
    %319 = vector.broadcast %cst_111 : f32 to vector<8x128xf32>
    %320 = arith.mulf %319, %318 : vector<8x128xf32>
    %cst_112 = arith.constant 5.000000e-01 : f32
    %321 = vector.broadcast %cst_112 : f32 to vector<8x128xf32>
    %322 = arith.addf %320, %321 : vector<8x128xf32>
    %323 = arith.mulf %312, %284 : vector<8x128xf32>
    %324 = arith.mulf %304, %314 : vector<8x128xf32>
    %325 = arith.addf %323, %324 : vector<8x128xf32>
    %326 = math.tanh %325 : vector<8x128xf32>
    %327 = arith.mulf %322, %326 : vector<8x128xf32>
    %c0_113 = arith.constant 0 : index
    %c0_114 = arith.constant 0 : index
    %328 = vector.load %arg4[%c0_113, %c0_114] : memref<128x128xf32, #tpu.memory_space<vmem>>, vector<128x128xf32>
    %cst_115 = arith.constant dense<0.000000e+00> : vector<8x128xf32>
    %329 = tpu.matmul %327, %328, %cst_115 {dimension_numbers = #tpu.dot_dimension_numbers<[1], [0], [0], [1], [0, 0, 1, 1], [], []>} : vector<8x128xf32>, vector<128x128xf32>, vector<8x128xf32> -> vector<8x128xf32>
    %c0_116 = arith.constant 0 : index
    %c0_117 = arith.constant 0 : index
    %330 = vector.load %arg5[%c0_116, %c0_117] : memref<1x128xf32, #tpu.memory_space<vmem>>, vector<1x128xf32>
    %331 = vector.broadcast %330 : vector<1x128xf32> to vector<8x128xf32>
    %332 = arith.addf %329, %331 : vector<8x128xf32>
    %c0_118 = arith.constant 0 : index
    %c0_119 = arith.constant 0 : index
    %333 = vector.load %arg6[%c0_118, %c0_119] : memref<8x128xf32, #tpu.memory_space<vmem>>, vector<8x128xf32>
    tpu.vector_store %arg6[%c0_118, %c0_119], %332 {strides = array<i32>} : memref<8x128xf32, #tpu.memory_space<vmem>>, vector<8x128xf32>,
    return
  }
}

</mosaic_0001>

<llo_original>
// kernel: _forward_impl.1
$region0: #{_forward_impl.1}
  #allocation0 [shape = 'u32[]', space=smem, size = 0x4, offset = 0x4, fixed_abs, tag = 'smem constant byte address 0x4 - core index']
  #allocation1 [shape = 'u32[144,128]{1,0:T(1,128)}', space=vmem, size = 0x12000, scoped, tag = 'internal scratch']
  %s0 = inlined_call_operand.vmem [shape: f32[8,8,1], index: 0, kind: input, shape index: {}]
  %s1 = inlined_call_operand.vmem [shape: f32[1,512], index: 1, kind: input, shape index: {}]
  %s2 = inlined_call_operand.hbm [shape: f32[128,512], index: 2, kind: input, shape index: {}]
  %s3 = inlined_call_operand.vmem [shape: f32[1,512], index: 3, kind: input, shape index: {}]
  %s4 = inlined_call_operand.hbm [shape: f32[128,128], index: 4, kind: input, shape index: {}]
  %s5 = inlined_call_operand.vmem [shape: f32[1,128], index: 5, kind: input, shape index: {}]
  %s6 = inlined_call_operand.vmem [shape: f32[8,128], index: 6, kind: output, shape index: {}]
  %s7 = sld [smem:[#allocation0]]
  $region42: #{_forward_impl.1} parent=0
    _
  %s9 = ssub.s32 1, %s7
  %s10 = scalar_select 0, %s9, %s7
  $region1: #{_forward_impl.1} parent=0
    #allocation2 [shape = 'u8[262144]{0}', space=vmem, size = 0x40000, scoped, tag = 'input window, operand 2, single buffered']
    #allocation3 [shape = 's32[1]{0}', space=sflag, size = 0x4, scoped, tag = 'scoped memory for _forward_impl.1']
    #allocation4 [shape = 'u8[65536]{0}', space=vmem, size = 0x10000, scoped, tag = 'input window, operand 4, single buffered']
    #allocation5 [shape = 's32[1]{0}', space=sflag, size = 0x4, scoped, tag = 'scoped memory for _forward_impl.1']
    %11 = vsyncpa [#allocation3], 0
    %12 = vsyncpa [#allocation5], 0
    // Predicated region
    $region2: #{_forward_impl.1} parent=1 // pred_check
      _
    $region3: #{_forward_impl.1} parent=1 // pred_check_branch
      %14 = sbr.rel (0) target = $region5
    $region4: #{_forward_impl.1} parent=1 // pred_region
      _
    $region5: #{_forward_impl.1} parent=1 // pred_fallthru
      _
    // Predicated region
    $region6: #{_forward_impl.1} parent=1 // pred_check
      _
    $region7: #{_forward_impl.1} parent=1 // pred_check_branch
      %16 = sbr.rel (0) target = $region9
    $region8: #{_forward_impl.1} parent=1 // pred_region
      _
    $region9: #{_forward_impl.1} parent=1 // pred_fallthru
      _
    // Predicated region
    $region10: #{_forward_impl.1} parent=1 // pred_check
      _
    $region11: #{_forward_impl.1} parent=1 // pred_check_branch
      %18 = sbr.rel (0) target = $region13
    $region12: #{_forward_impl.1} parent=1 // pred_region
      %s20 = ssub.s32 8192, 8192
      %21 = vsyncadd [#allocation3], %s20
      %s22 = sshll.u32 [#allocation2], 4
      %s23 = int_to_ptr.vmem [resolvable:$true] %s22
      %28 = dma.hbm_to_vmem [thread:$0]  %s2, 8192, %s23, [#allocation3], 512, 512, 32
    $region13: #{_forward_impl.1} parent=1 // pred_fallthru
      _
    // Predicated region
    $region14: #{_forward_impl.1} parent=1 // pred_check
      _
    $region15: #{_forward_impl.1} parent=1 // pred_check_branch
      %30 = sbr.rel (0) target = $region17
    $region16: #{_forward_impl.1} parent=1 // pred_region
      _
    $region17: #{_forward_impl.1} parent=1 // pred_fallthru
      _
    // Predicated region
    $region18: #{_forward_impl.1} parent=1 // pred_check
      _
    $region19: #{_forward_impl.1} parent=1 // pred_check_branch
      %32 = sbr.rel (0) target = $region21
    $region20: #{_forward_impl.1} parent=1 // pred_region
      %s34 = ssub.s32 2048, 2048
      %35 = vsyncadd [#allocation5], %s34
      %s36 = sshll.u32 [#allocation4], 4
      %s37 = int_to_ptr.vmem [resolvable:$true] %s36
      %42 = dma.hbm_to_vmem [thread:$0]  %s4, 2048, %s37, [#allocation5], 128, 128, 8
    $region21: #{_forward_impl.1} parent=1 // pred_fallthru
      _
    // Predicated region
    $region22: #{_forward_impl.1} parent=1 // pred_check
      _
    $region23: #{_forward_impl.1} parent=1 // pred_check_branch
      %44 = sbr.rel (0) target = $region25
    $region24: #{_forward_impl.1} parent=1 // pred_region
      _
    $region25: #{_forward_impl.1} parent=1 // pred_fallthru
      _
    // Predicated region
    $region26: #{_forward_impl.1} parent=1 // pred_check
      _
    $region27: #{_forward_impl.1} parent=1 // pred_check_branch
      %46 = sbr.rel (0) target = $region29
    $region28: #{_forward_impl.1} parent=1 // pred_region
      %47 = dma.done [#allocation3], 8192
    $region29: #{_forward_impl.1} parent=1 // pred_fallthru
      _
    // Predicated region
    $region30: #{_forward_impl.1} parent=1 // pred_check
      _
    $region31: #{_forward_impl.1} parent=1 // pred_check_branch
      %49 = sbr.rel (0) target = $region33
    $region32: #{_forward_impl.1} parent=1 // pred_region
      %50 = dma.done [#allocation5], 2048
    $region33: #{_forward_impl.1} parent=1 // pred_fallthru
      _
    %v51 = vld [vmem:[%s1] sm:$0xf]
    %v52 = vld [vmem:[%s3] sm:$0xf]
    %v53 = vld [vmem:[%s0] sm:$0xff]
    %55 = vset.pattern.permute.xlu0 0
    %56 = vperm.xlu0 %55, %v53
    %v57 = vpop.permute.xlu0 %56
    %v60 = vlaneseq
    %v61 = vshrl.u32 %v60, 7
    %v62 = vsub.s32 0, %v61
    %v63 = vrot.slane %v51, %v62
    %v64 = vlaneseq
    %v65 = vshrl.u32 %v64, 7
    %v66 = vsub.s32 1, %v65
    %v67 = vrot.slane %v51, %v66
    %v68 = vlaneseq
    %v69 = vshrl.u32 %v68, 7
    %v70 = vsub.s32 2, %v69
    %v71 = vrot.slane %v51, %v70
    %v72 = vlaneseq
    %v73 = vshrl.u32 %v72, 7
    %v74 = vsub.s32 3, %v73
    %v75 = vrot.slane %v51, %v74
    %v80 = vmul.f32 %v57, %v63
    %v81 = vmul.f32 %v57, %v67
    %v82 = vmul.f32 %v57, %v71
    %v83 = vmul.f32 %v57, %v75
    %v85 = vlaneseq
    %v86 = vshrl.u32 %v85, 7
    %v87 = vsub.s32 0, %v86
    %v88 = vrot.slane %v52, %v87
    %v89 = vlaneseq
    %v90 = vshrl.u32 %v89, 7
    %v91 = vsub.s32 1, %v90
    %v92 = vrot.slane %v52, %v91
    %v93 = vlaneseq
    %v94 = vshrl.u32 %v93, 7
    %v95 = vsub.s32 2, %v94
    %v96 = vrot.slane %v52, %v95
    %v97 = vlaneseq
    %v98 = vshrl.u32 %v97, 7
    %v99 = vsub.s32 3, %v98
    %v100 = vrot.slane %v52, %v99
    %v105 = vadd.f32 %v80, %v88
    %v106 = vadd.f32 %v81, %v92
    %v107 = vadd.f32 %v82, %v96
    %v108 = vadd.f32 %v83, %v100
    %v109 = vmul.f32 %v105, 0.5
    %v110 = vtanh.pop %v109
    %v111 = vmul.f32 %v110, 0.5
    %v112 = vadd.f32 %v111, 0.5
    %v113 = vmul.f32 %v106, 0.5
    %v114 = vtanh.pop %v113
    %v115 = vmul.f32 %v114, 0.5
    %v116 = vadd.f32 %v115, 0.5
    %v117 = vtanh.pop %v107
    %v118 = vmul.f32 %v108, 0.5
    %v119 = vtanh.pop %v118
    %v120 = vmul.f32 %v119, 0.5
    %v121 = vadd.f32 %v120, 0.5
    %v122 = vmul.f32 %v116, 0.0
    %v123 = vmul.f32 %v112, %v117
    %v124 = vadd.f32 %v122, %v123
    %v125 = vtanh.pop %v124
    %v126 = vmul.f32 %v121, %v125
    %s127 = scalar_lea.vmem %s0, 8
    %v128 = vld [vmem:[%s127] sm:$0xff]
    %130 = vset.pattern.permute.xlu0 0
    %131 = vperm.xlu0 %130, %v128
    %v132 = vpop.permute.xlu0 %131
    %v134 = vmul.f32 %v132, %v63
    %v135 = vmul.f32 %v132, %v67
    %v136 = vmul.f32 %v132, %v71
    %v137 = vmul.f32 %v132, %v75
    %v138 = vadd.f32 %v134, %v88
    %v139 = vadd.f32 %v135, %v92
    %v140 = vadd.f32 %v136, %v96
    %v141 = vadd.f32 %v137, %v100
    %v142 = vld [vmem:[#allocation2] sm:$0xff]
    %v143 = vld [vmem:[#allocation2 + $0x8] sm:$0xff]
    %v144 = vld [vmem:[#allocation2 + $0x10] sm:$0xff]
    %v145 = vld [vmem:[#allocation2 + $0x18] sm:$0xff]
    %v146 = vld [vmem:[#allocation2 + $0x20] sm:$0xff]
    %v147 = vld [vmem:[#allocation2 + $0x28] sm:$0xff]
    %v148 = vld [vmem:[#allocation2 + $0x30] sm:$0xff]
    %v149 = vld [vmem:[#allocation2 + $0x38] sm:$0xff]
    %v150 = vld [vmem:[#allocation2 + $0x40] sm:$0xff]
    %v151 = vld [vmem:[#allocation2 + $0x48] sm:$0xff]
    %v152 = vld [vmem:[#allocation2 + $0x50] sm:$0xff]
    %v153 = vld [vmem:[#allocation2 + $0x58] sm:$0xff]
    %v154 = vld [vmem:[#allocation2 + $0x60] sm:$0xff]
    %v155 = vld [vmem:[#allocation2 + $0x68] sm:$0xff]
    %v156 = vld [vmem:[#allocation2 + $0x70] sm:$0xff]
    %v157 = vld [vmem:[#allocation2 + $0x78] sm:$0xff]
    %v158 = vld [vmem:[#allocation2 + $0x80] sm:$0xff]
    %v159 = vld [vmem:[#allocation2 + $0x88] sm:$0xff]
    %v160 = vld [vmem:[#allocation2 + $0x90] sm:$0xff]
    %v161 = vld [vmem:[#allocation2 + $0x98] sm:$0xff]
    %v162 = vld [vmem:[#allocation2 + $0xa0] sm:$0xff]
    %v163 = vld [vmem:[#allocation2 + $0xa8] sm:$0xff]
    %v164 = vld [vmem:[#allocation2 + $0xb0] sm:$0xff]
    %v165 = vld [vmem:[#allocation2 + $0xb8] sm:$0xff]
    %v166 = vld [vmem:[#allocation2 + $0xc0] sm:$0xff]
    %v167 = vld [vmem:[#allocation2 + $0xc8] sm:$0xff]
    %v168 = vld [vmem:[#allocation2 + $0xd0] sm:$0xff]
    %v169 = vld [vmem:[#allocation2 + $0xd8] sm:$0xff]
    %v170 = vld [vmem:[#allocation2 + $0xe0] sm:$0xff]
    %v171 = vld [vmem:[#allocation2 + $0xe8] sm:$0xff]
    %v172 = vld [vmem:[#allocation2 + $0xf0] sm:$0xff]
    %v173 = vld [vmem:[#allocation2 + $0xf8] sm:$0xff]
    %v174 = vld [vmem:[#allocation2 + $0x100] sm:$0xff]
    %v175 = vld [vmem:[#allocation2 + $0x108] sm:$0xff]
    %v176 = vld [vmem:[#allocation2 + $0x110] sm:$0xff]
    %v177 = vld [vmem:[#allocation2 + $0x118] sm:$0xff]
    %v178 = vld [vmem:[#allocation2 + $0x120] sm:$0xff]
    %v179 = vld [vmem:[#allocation2 + $0x128] sm:$0xff]
    %v180 = vld [vmem:[#allocation2 + $0x130] sm:$0xff]
    %v181 = vld [vmem:[#allocation2 + $0x138] sm:$0xff]
    %v182 = vld [vmem:[#allocation2 + $0x140] sm:$0xff]
    %v183 = vld [vmem:[#allocation2 + $0x148] sm:$0xff]
    %v184 = vld [vmem:[#allocation2 + $0x150] sm:$0xff]
    %v185 = vld [vmem:[#allocation2 + $0x158] sm:$0xff]
    %v186 = vld [vmem:[#allocation2 + $0x160] sm:$0xff]
    %v187 = vld [vmem:[#allocation2 + $0x168] sm:$0xff]
    %v188 = vld [vmem:[#allocation2 + $0x170] sm:$0xff]
    %v189 = vld [vmem:[#allocation2 + $0x178] sm:$0xff]
    %v190 = vld [vmem:[#allocation2 + $0x180] sm:$0xff]
    %v191 = vld [vmem:[#allocation2 + $0x188] sm:$0xff]
    %v192 = vld [vmem:[#allocation2 + $0x190] sm:$0xff]
    %v193 = vld [vmem:[#allocation2 + $0x198] sm:$0xff]
    %v194 = vld [vmem:[#allocation2 + $0x1a0] sm:$0xff]
    %v195 = vld [vmem:[#allocation2 + $0x1a8] sm:$0xff]
    %v196 = vld [vmem:[#allocation2 + $0x1b0] sm:$0xff]
    %v197 = vld [vmem:[#allocation2 + $0x1b8] sm:$0xff]
    %v198 = vld [vmem:[#allocation2 + $0x1c0] sm:$0xff]
    %v199 = vld [vmem:[#allocation2 + $0x1c8] sm:$0xff]
    %v200 = vld [vmem:[#allocation2 + $0x1d0] sm:$0xff]
    %v201 = vld [vmem:[#allocation2 + $0x1d8] sm:$0xff]
    %v202 = vld [vmem:[#allocation2 + $0x1e0] sm:$0xff]
    %v203 = vld [vmem:[#allocation2 + $0x1e8] sm:$0xff]
    %v204 = vld [vmem:[#allocation2 + $0x1f0] sm:$0xff]
    %v205 = vld [vmem:[#allocation2 + $0x1f8] sm:$0xff]
    %206 = vmatprep.subr.mxu0 %v203
    %207 = vmatpush1.msra.mxu0 %v202
    %208 = vmatprep.subr.mxu0 %v199
    %209 = vmatpush1.msra.mxu0 %v198
    %210 = vmatprep.subr.mxu0 %v195
    %211 = vmatpush1.msra.mxu0 %v194
    %212 = vmatprep.subr.mxu0 %v191
    %213 = vmatpush1.msra.mxu0 %v190
    %214 = vmatprep.subr.mxu0 %v187
    %215 = vmatpush1.msra.mxu0 %v186
    %216 = vmatprep.subr.mxu0 %v183
    %217 = vmatpush1.msra.mxu0 %v182
    %218 = vmatprep.subr.mxu0 %v179
    %219 = vmatpush1.msra.mxu0 %v178
    %220 = vmatprep.subr.mxu0 %v175
    %221 = vmatpush1.msra.mxu0 %v174
    %222 = vmatprep.subr.mxu0 %v171
    %223 = vmatpush1.msra.mxu0 %v170
    %224 = vmatprep.subr.mxu0 %v167
    %225 = vmatpush1.msra.mxu0 %v166
    %226 = vmatprep.subr.mxu0 %v163
    %227 = vmatpush1.msra.mxu0 %v162
    %228 = vmatprep.subr.mxu0 %v159
    %229 = vmatpush1.msra.mxu0 %v158
    %230 = vmatprep.subr.mxu0 %v155
    %231 = vmatpush1.msra.mxu0 %v154
    %232 = vmatprep.subr.mxu0 %v151
    %233 = vmatpush1.msra.mxu0 %v150
    %234 = vmatprep.subr.mxu0 %v147
    %235 = vmatpush1.msra.mxu0 %v146
    %236 = vmatprep.subr.mxu0 %v143
    %237 = vmatpush1.msra.mxu0 %v142
    %238 = vmatprep.subr.mxu0 0.0
    %239 = vmatpush2.msra.mxu0 0.0
    %240 = vmatprep.subr.mxu0 0.0
    %241 = vmatpush2.msra.mxu0 0.0
    %242 = vmatprep.subr.mxu0 0.0
    %243 = vmatpush2.msra.mxu0 0.0
    %244 = vmatprep.subr.mxu0 0.0
    %245 = vmatpush2.msra.mxu0 0.0
    %246 = vmatprep.subr.mxu0 0.0
    %247 = vmatpush2.msra.mxu0 0.0
    %248 = vmatprep.subr.mxu0 0.0
    %249 = vmatpush2.msra.mxu0 0.0
    %250 = vmatprep.subr.mxu0 0.0
    %251 = vmatpush2.msra.mxu0 0.0
    %252 = vmatprep.subr.mxu0 0.0
    %253 = vmatpush2.msra.mxu0 0.0
    %254 = vmatprep.subr.mxu0 0.0
    %255 = vmatpush2.msra.mxu0 0.0
    %256 = vmatprep.subr.mxu0 0.0
    %257 = vmatpush2.msra.mxu0 0.0
    %258 = vmatprep.subr.mxu0 0.0
    %259 = vmatpush2.msra.mxu0 0.0
    %260 = vmatprep.subr.mxu0 0.0
    %261 = vmatpush2.msra.mxu0 0.0
    %262 = vmatprep.subr.mxu0 0.0
    %263 = vmatpush2.msra.mxu0 0.0
    %264 = vmatprep.subr.mxu0 0.0
    %265 = vmatpush2.msra.mxu0 0.0
    %266 = vmatprep.subr.mxu0 0.0
    %267 = vmatpush2.msra.mxu0 0.0
    %268 = vmatprep.subr.mxu0 0.0
    %269 = vmatpush2.msra.mxu0 0.0
    %270 = vmatprep.mubr.f32.mxu0 0.0
    %271 = vmatmul.mubr.f32.gmra.mxu0 %v126
    %v272 = vpop.f32.mrf.mxu0
    %v273 = vadd.f32 0.0, %v272
    %v274 = vpop.f32.mrf.mxu0
    %v275 = vadd.f32 0.0, %v274
    %276 = vdwg.mxu0
    %277 = vmatprep.subr.mxu0 %v205
    %278 = vmatpush1.msra.mxu0 %v204
    %279 = vmatprep.subr.mxu0 %v201
    %280 = vmatpush1.msra.mxu0 %v200
    %281 = vmatprep.subr.mxu0 %v197
    %282 = vmatpush1.msra.mxu0 %v196
    %283 = vmatprep.subr.mxu0 %v193
    %284 = vmatpush1.msra.mxu0 %v192
    %285 = vmatprep.subr.mxu0 %v189
    %286 = vmatpush1.msra.mxu0 %v188
    %287 = vmatprep.subr.mxu0 %v185
    %288 = vmatpush1.msra.mxu0 %v184
    %289 = vmatprep.subr.mxu0 %v181
    %290 = vmatpush1.msra.mxu0 %v180
    %291 = vmatprep.subr.mxu0 %v177
    %292 = vmatpush1.msra.mxu0 %v176
    %293 = vmatprep.subr.mxu0 %v173
    %294 = vmatpush1.msra.mxu0 %v172
    %295 = vmatprep.subr.mxu0 %v169
    %296 = vmatpush1.msra.mxu0 %v168
    %297 = vmatprep.subr.mxu0 %v165
    %298 = vmatpush1.msra.mxu0 %v164
    %299 = vmatprep.subr.mxu0 %v161
    %300 = vmatpush1.msra.mxu0 %v160
    %301 = vmatprep.subr.mxu0 %v157
    %302 = vmatpush1.msra.mxu0 %v156
    %303 = vmatprep.subr.mxu0 %v153
    %304 = vmatpush1.msra.mxu0 %v152
    %305 = vmatprep.subr.mxu0 %v149
    %306 = vmatpush1.msra.mxu0 %v148
    %307 = vmatprep.subr.mxu0 %v145
    %308 = vmatpush1.msra.mxu0 %v144
    %309 = vmatprep.subr.mxu0 0.0
    %310 = vmatpush2.msra.mxu0 0.0
    %311 = vmatprep.subr.mxu0 0.0
    %312 = vmatpush2.msra.mxu0 0.0
    %313 = vmatprep.subr.mxu0 0.0
    %314 = vmatpush2.msra.mxu0 0.0
    %315 = vmatprep.subr.mxu0 0.0
    %316 = vmatpush2.msra.mxu0 0.0
    %317 = vmatprep.subr.mxu0 0.0
    %318 = vmatpush2.msra.mxu0 0.0
    %319 = vmatprep.subr.mxu0 0.0
    %320 = vmatpush2.msra.mxu0 0.0
    %321 = vmatprep.subr.mxu0 0.0
    %322 = vmatpush2.msra.mxu0 0.0
    %323 = vmatprep.subr.mxu0 0.0
    %324 = vmatpush2.msra.mxu0 0.0
    %325 = vmatprep.subr.mxu0 0.0
    %326 = vmatpush2.msra.mxu0 0.0
    %327 = vmatprep.subr.mxu0 0.0
    %328 = vmatpush2.msra.mxu0 0.0
    %329 = vmatprep.subr.mxu0 0.0
    %330 = vmatpush2.msra.mxu0 0.0
    %331 = vmatprep.subr.mxu0 0.0
    %332 = vmatpush2.msra.mxu0 0.0
    %333 = vmatprep.subr.mxu0 0.0
    %334 = vmatpush2.msra.mxu0 0.0
    %335 = vmatprep.subr.mxu0 0.0
    %336 = vmatpush2.msra.mxu0 0.0
    %337 = vmatprep.subr.mxu0 0.0
    %338 = vmatpush2.msra.mxu0 0.0
    %339 = vmatprep.subr.mxu0 0.0
    %340 = vmatpush2.msra.mxu0 0.0
    %341 = vmatprep.mubr.f32.mxu0 0.0
    %342 = vmatmul.mubr.f32.gmra.mxu0 %v126
    %v343 = vpop.f32.mrf.mxu0
    %v344 = vadd.f32 0.0, %v343
    %v345 = vpop.f32.mrf.mxu0
    %v346 = vadd.f32 0.0, %v345
    %347 = vdwg.mxu0
    %v348 = vadd.f32 %v138, %v273
    %v349 = vadd.f32 %v139, %v275
    %v350 = vadd.f32 %v140, %v344
    %v351 = vadd.f32 %v141, %v346
    %v352 = vmul.f32 %v348, 0.5
    %v353 = vtanh.pop %v352
    %v354 = vmul.f32 %v353, 0.5
    %v355 = vadd.f32 %v354, 0.5
    %v356 = vmul.f32 %v349, 0.5
    %v357 = vtanh.pop %v356
    %v358 = vmul.f32 %v357, 0.5
    %v359 = vadd.f32 %v358, 0.5
    %v360 = vtanh.pop %v350
    %v361 = vmul.f32 %v351, 0.5
    %v362 = vtanh.pop %v361
    %v363 = vmul.f32 %v362, 0.5
    %v364 = vadd.f32 %v363, 0.5
    %v365 = vmul.f32 %v359, %v124
    %v366 = vmul.f32 %v355, %v360
    %v367 = vadd.f32 %v365, %v366
    %v368 = vtanh.pop %v367
    %v369 = vmul.f32 %v364, %v368
    %s370 = scalar_lea.vmem %s0, 16
    %v371 = vld [vmem:[%s370] sm:$0xff]
    %373 = vset.pattern.permute.xlu0 0
    %374 = vperm.xlu0 %373, %v371
    %v375 = vpop.permute.xlu0 %374
    %v377 = vmul.f32 %v375, %v63
    %v378 = vmul.f32 %v375, %v67
    %v379 = vmul.f32 %v375, %v71
    %v380 = vmul.f32 %v375, %v75
    %v381 = vadd.f32 %v377, %v88
    %v382 = vadd.f32 %v378, %v92
    %v383 = vadd.f32 %v379, %v96
    %v384 = vadd.f32 %v380, %v100
    %385 = vmatprep.subr.mxu0 %v203
    %386 = vmatpush1.msra.mxu0 %v202
    %387 = vmatprep.subr.mxu0 %v199
    %388 = vmatpush1.msra.mxu0 %v198
    %389 = vmatprep.subr.mxu0 %v195
    %390 = vmatpush1.msra.mxu0 %v194
    %391 = vmatprep.subr.mxu0 %v191
    %392 = vmatpush1.msra.mxu0 %v190
    %393 = vmatprep.subr.mxu0 %v187
    %394 = vmatpush1.msra.mxu0 %v186
    %395 = vmatprep.subr.mxu0 %v183
    %396 = vmatpush1.msra.mxu0 %v182
    %397 = vmatprep.subr.mxu0 %v179
    %398 = vmatpush1.msra.mxu0 %v178
    %399 = vmatprep.subr.mxu0 %v175
    %400 = vmatpush1.msra.mxu0 %v174
    %401 = vmatprep.subr.mxu0 %v171
    %402 = vmatpush1.msra.mxu0 %v170
    %403 = vmatprep.subr.mxu0 %v167
    %404 = vmatpush1.msra.mxu0 %v166
    %405 = vmatprep.subr.mxu0 %v163
    %406 = vmatpush1.msra.mxu0 %v162
    %407 = vmatprep.subr.mxu0 %v159
    %408 = vmatpush1.msra.mxu0 %v158
    %409 = vmatprep.subr.mxu0 %v155
    %410 = vmatpush1.msra.mxu0 %v154
    %411 = vmatprep.subr.mxu0 %v151
    %412 = vmatpush1.msra.mxu0 %v150
    %413 = vmatprep.subr.mxu0 %v147
    %414 = vmatpush1.msra.mxu0 %v146
    %415 = vmatprep.subr.mxu0 %v143
    %416 = vmatpush1.msra.mxu0 %v142
    %417 = vmatprep.subr.mxu0 0.0
    %418 = vmatpush2.msra.mxu0 0.0
    %419 = vmatprep.subr.mxu0 0.0
    %420 = vmatpush2.msra.mxu0 0.0
    %421 = vmatprep.subr.mxu0 0.0
    %422 = vmatpush2.msra.mxu0 0.0
    %423 = vmatprep.subr.mxu0 0.0
    %424 = vmatpush2.msra.mxu0 0.0
    %425 = vmatprep.subr.mxu0 0.0
    %426 = vmatpush2.msra.mxu0 0.0
    %427 = vmatprep.subr.mxu0 0.0
    %428 = vmatpush2.msra.mxu0 0.0
    %429 = vmatprep.subr.mxu0 0.0
    %430 = vmatpush2.msra.mxu0 0.0
    %431 = vmatprep.subr.mxu0 0.0
    %432 = vmatpush2.msra.mxu0 0.0
    %433 = vmatprep.subr.mxu0 0.0
    %434 = vmatpush2.msra.mxu0 0.0
    %435 = vmatprep.subr.mxu0 0.0
    %436 = vmatpush2.msra.mxu0 0.0
    %437 = vmatprep.subr.mxu0 0.0
    %438 = vmatpush2.msra.mxu0 0.0
    %439 = vmatprep.subr.mxu0 0.0
    %440 = vmatpush2.msra.mxu0 0.0
    %441 = vmatprep.subr.mxu0 0.0
    %442 = vmatpush2.msra.mxu0 0.0
    %443 = vmatprep.subr.mxu0 0.0
    %444 = vmatpush2.msra.mxu0 0.0
    %445 = vmatprep.subr.mxu0 0.0
    %446 = vmatpush2.msra.mxu0 0.0
    %447 = vmatprep.subr.mxu0 0.0
    %448 = vmatpush2.msra.mxu0 0.0
    %449 = vmatprep.mubr.f32.mxu0 0.0
    %450 = vmatmul.mubr.f32.gmra.mxu0 %v369
    %v451 = vpop.f32.mrf.mxu0
    %v452 = vadd.f32 0.0, %v451
    %v453 = vpop.f32.mrf.mxu0
    %v454 = vadd.f32 0.0, %v453
    %455 = vdwg.mxu0
    %456 = vmatprep.subr.mxu0 %v205
    %457 = vmatpush1.msra.mxu0 %v204
    %458 = vmatprep.subr.mxu0 %v201
    %459 = vmatpush1.msra.mxu0 %v200
    %460 = vmatprep.subr.mxu0 %v197
    %461 = vmatpush1.msra.mxu0 %v196
    %462 = vmatprep.subr.mxu0 %v193
    %463 = vmatpush1.msra.mxu0 %v192
    %464 = vmatprep.subr.mxu0 %v189
    %465 = vmatpush1.msra.mxu0 %v188
    %466 = vmatprep.subr.mxu0 %v185
    %467 = vmatpush1.msra.mxu0 %v184
    %468 = vmatprep.subr.mxu0 %v181
    %469 = vmatpush1.msra.mxu0 %v180
    %470 = vmatprep.subr.mxu0 %v177
    %471 = vmatpush1.msra.mxu0 %v176
    %472 = vmatprep.subr.mxu0 %v173
    %473 = vmatpush1.msra.mxu0 %v172
    %474 = vmatprep.subr.mxu0 %v169
    %475 = vmatpush1.msra.mxu0 %v168
    %476 = vmatprep.subr.mxu0 %v165
    %477 = vmatpush1.msra.mxu0 %v164
    %478 = vmatprep.subr.mxu0 %v161
    %479 = vmatpush1.msra.mxu0 %v160
    %480 = vmatprep.subr.mxu0 %v157
    %481 = vmatpush1.msra.mxu0 %v156
    %482 = vmatprep.subr.mxu0 %v153
    %483 = vmatpush1.msra.mxu0 %v152
    %484 = vmatprep.subr.mxu0 %v149
    %485 = vmatpush1.msra.mxu0 %v148
    %486 = vmatprep.subr.mxu0 %v145
    %487 = vmatpush1.msra.mxu0 %v144
    %488 = vmatprep.subr.mxu0 0.0
    %489 = vmatpush2.msra.mxu0 0.0
    %490 = vmatprep.subr.mxu0 0.0
    %491 = vmatpush2.msra.mxu0 0.0
    %492 = vmatprep.subr.mxu0 0.0
    %493 = vmatpush2.msra.mxu0 0.0
    %494 = vmatprep.subr.mxu0 0.0
    %495 = vmatpush2.msra.mxu0 0.0
    %496 = vmatprep.subr.mxu0 0.0
    %497 = vmatpush2.msra.mxu0 0.0
    %498 = vmatprep.subr.mxu0 0.0
    %499 = vmatpush2.msra.mxu0 0.0
    %500 = vmatprep.subr.mxu0 0.0
    %501 = vmatpush2.msra.mxu0 0.0
    %502 = vmatprep.subr.mxu0 0.0
    %503 = vmatpush2.msra.mxu0 0.0
    %504 = vmatprep.subr.mxu0 0.0
    %505 = vmatpush2.msra.mxu0 0.0
    %506 = vmatprep.subr.mxu0 0.0
    %507 = vmatpush2.msra.mxu0 0.0
    %508 = vmatprep.subr.mxu0 0.0
    %509 = vmatpush2.msra.mxu0 0.0
    %510 = vmatprep.subr.mxu0 0.0
    %511 = vmatpush2.msra.mxu0 0.0
    %512 = vmatprep.subr.mxu0 0.0
    %513 = vmatpush2.msra.mxu0 0.0
    %514 = vmatprep.subr.mxu0 0.0
    %515 = vmatpush2.msra.mxu0 0.0
    %516 = vmatprep.subr.mxu0 0.0
    %517 = vmatpush2.msra.mxu0 0.0
    %518 = vmatprep.subr.mxu0 0.0
    %519 = vmatpush2.msra.mxu0 0.0
    %520 = vmatprep.mubr.f32.mxu0 0.0
    %521 = vmatmul.mubr.f32.gmra.mxu0 %v369
    %v522 = vpop.f32.mrf.mxu0
    %v523 = vadd.f32 0.0, %v522
    %v524 = vpop.f32.mrf.mxu0
    %v525 = vadd.f32 0.0, %v524
    %526 = vdwg.mxu0
    %v527 = vadd.f32 %v381, %v452
    %v528 = vadd.f32 %v382, %v454
    %v529 = vadd.f32 %v383, %v523
    %v530 = vadd.f32 %v384, %v525
    %v531 = vmul.f32 %v527, 0.5
    %v532 = vtanh.pop %v531
    %v533 = vmul.f32 %v532, 0.5
    %v534 = vadd.f32 %v533, 0.5
    %v535 = vmul.f32 %v528, 0.5
    %v536 = vtanh.pop %v535
    %v537 = vmul.f32 %v536, 0.5
    %v538 = vadd.f32 %v537, 0.5
    %v539 = vtanh.pop %v529
    %v540 = vmul.f32 %v530, 0.5
    %v541 = vtanh.pop %v540
    %v542 = vmul.f32 %v541, 0.5
    %v543 = vadd.f32 %v542, 0.5
    %v544 = vmul.f32 %v538, %v367
    %v545 = vmul.f32 %v534, %v539
    %v546 = vadd.f32 %v544, %v545
    %v547 = vtanh.pop %v546
    %v548 = vmul.f32 %v543, %v547
    %s549 = scalar_lea.vmem %s0, 24
    %v550 = vld [vmem:[%s549] sm:$0xff]
    %552 = vset.pattern.permute.xlu0 0
    %553 = vperm.xlu0 %552, %v550
    %v554 = vpop.permute.xlu0 %553
    %v556 = vmul.f32 %v554, %v63
    %v557 = vmul.f32 %v554, %v67
    %v558 = vmul.f32 %v554, %v71
    %v559 = vmul.f32 %v554, %v75
    %v560 = vadd.f32 %v556, %v88
    %v561 = vadd.f32 %v557, %v92
    %v562 = vadd.f32 %v558, %v96
    %v563 = vadd.f32 %v559, %v100
    %564 = vmatprep.subr.mxu0 %v203
    %565 = vmatpush1.msra.mxu0 %v202
    %566 = vmatprep.subr.mxu0 %v199
    %567 = vmatpush1.msra.mxu0 %v198
    %568 = vmatprep.subr.mxu0 %v195
    %569 = vmatpush1.msra.mxu0 %v194
    %570 = vmatprep.subr.mxu0 %v191
    %571 = vmatpush1.msra.mxu0 %v190
    %572 = vmatprep.subr.mxu0 %v187
    %573 = vmatpush1.msra.mxu0 %v186
    %574 = vmatprep.subr.mxu0 %v183
    %575 = vmatpush1.msra.mxu0 %v182
    %576 = vmatprep.subr.mxu0 %v179
    %577 = vmatpush1.msra.mxu0 %v178
    %578 = vmatprep.subr.mxu0 %v175
    %579 = vmatpush1.msra.mxu0 %v174
    %580 = vmatprep.subr.mxu0 %v171
    %581 = vmatpush1.msra.mxu0 %v170
    %582 = vmatprep.subr.mxu0 %v167
    %583 = vmatpush1.msra.mxu0 %v166
    %584 = vmatprep.subr.mxu0 %v163
    %585 = vmatpush1.msra.mxu0 %v162
    %586 = vmatprep.subr.mxu0 %v159
    %587 = vmatpush1.msra.mxu0 %v158
    %588 = vmatprep.subr.mxu0 %v155
    %589 = vmatpush1.msra.mxu0 %v154
    %590 = vmatprep.subr.mxu0 %v151
    %591 = vmatpush1.msra.mxu0 %v150
    %592 = vmatprep.subr.mxu0 %v147
    %593 = vmatpush1.msra.mxu0 %v146
    %594 = vmatprep.subr.mxu0 %v143
    %595 = vmatpush1.msra.mxu0 %v142
    %596 = vmatprep.subr.mxu0 0.0
    %597 = vmatpush2.msra.mxu0 0.0
    %598 = vmatprep.subr.mxu0 0.0
    %599 = vmatpush2.msra.mxu0 0.0
    %600 = vmatprep.subr.mxu0 0.0
    %601 = vmatpush2.msra.mxu0 0.0
    %602 = vmatprep.subr.mxu0 0.0
    %603 = vmatpush2.msra.mxu0 0.0
    %604 = vmatprep.subr.mxu0 0.0
    %605 = vmatpush2.msra.mxu0 0.0
    %606 = vmatprep.subr.mxu0 0.0
    %607 = vmatpush2.msra.mxu0 0.0
    %608 = vmatprep.subr.mxu0 0.0
    %609 = vmatpush2.msra.mxu0 0.0
    %610 = vmatprep.subr.mxu0 0.0
    %611 = vmatpush2.msra.mxu0 0.0
    %612 = vmatprep.subr.mxu0 0.0
    %613 = vmatpush2.msra.mxu0 0.0
    %614 = vmatprep.subr.mxu0 0.0
    %615 = vmatpush2.msra.mxu0 0.0
    %616 = vmatprep.subr.mxu0 0.0
    %617 = vmatpush2.msra.mxu0 0.0
    %618 = vmatprep.subr.mxu0 0.0
    %619 = vmatpush2.msra.mxu0 0.0
    %620 = vmatprep.subr.mxu0 0.0
    %621 = vmatpush2.msra.mxu0 0.0
    %622 = vmatprep.subr.mxu0 0.0
    %623 = vmatpush2.msra.mxu0 0.0
    %624 = vmatprep.subr.mxu0 0.0
    %625 = vmatpush2.msra.mxu0 0.0
    %626 = vmatprep.subr.mxu0 0.0
    %627 = vmatpush2.msra.mxu0 0.0
    %628 = vmatprep.mubr.f32.mxu0 0.0
    %629 = vmatmul.mubr.f32.gmra.mxu0 %v548
    %v630 = vpop.f32.mrf.mxu0
    %v631 = vadd.f32 0.0, %v630
    %v632 = vpop.f32.mrf.mxu0
    %v633 = vadd.f32 0.0, %v632
    %634 = vdwg.mxu0
    %635 = vmatprep.subr.mxu0 %v205
    %636 = vmatpush1.msra.mxu0 %v204
    %637 = vmatprep.subr.mxu0 %v201
    %638 = vmatpush1.msra.mxu0 %v200
    %639 = vmatprep.subr.mxu0 %v197
    %640 = vmatpush1.msra.mxu0 %v196
    %641 = vmatprep.subr.mxu0 %v193
    %642 = vmatpush1.msra.mxu0 %v192
    %643 = vmatprep.subr.mxu0 %v189
    %644 = vmatpush1.msra.mxu0 %v188
    %645 = vmatprep.subr.mxu0 %v185
    %646 = vmatpush1.msra.mxu0 %v184
    %647 = vmatprep.subr.mxu0 %v181
    %648 = vmatpush1.msra.mxu0 %v180
    %649 = vmatprep.subr.mxu0 %v177
    %650 = vmatpush1.msra.mxu0 %v176
    %651 = vmatprep.subr.mxu0 %v173
    %652 = vmatpush1.msra.mxu0 %v172
    %653 = vmatprep.subr.mxu0 %v169
    %654 = vmatpush1.msra.mxu0 %v168
    %655 = vmatprep.subr.mxu0 %v165
    %656 = vmatpush1.msra.mxu0 %v164
    %657 = vmatprep.subr.mxu0 %v161
    %658 = vmatpush1.msra.mxu0 %v160
    %659 = vmatprep.subr.mxu0 %v157
    %660 = vmatpush1.msra.mxu0 %v156
    %661 = vmatprep.subr.mxu0 %v153
    %662 = vmatpush1.msra.mxu0 %v152
    %663 = vmatprep.subr.mxu0 %v149
    %664 = vmatpush1.msra.mxu0 %v148
    %665 = vmatprep.subr.mxu0 %v145
    %666 = vmatpush1.msra.mxu0 %v144
    %667 = vmatprep.subr.mxu0 0.0
    %668 = vmatpush2.msra.mxu0 0.0
    %669 = vmatprep.subr.mxu0 0.0
    %670 = vmatpush2.msra.mxu0 0.0
    %671 = vmatprep.subr.mxu0 0.0
    %672 = vmatpush2.msra.mxu0 0.0
    %673 = vmatprep.subr.mxu0 0.0
    %674 = vmatpush2.msra.mxu0 0.0
    %675 = vmatprep.subr.mxu0 0.0
    %676 = vmatpush2.msra.mxu0 0.0
    %677 = vmatprep.subr.mxu0 0.0
    %678 = vmatpush2.msra.mxu0 0.0
    %679 = vmatprep.subr.mxu0 0.0
    %680 = vmatpush2.msra.mxu0 0.0
    %681 = vmatprep.subr.mxu0 0.0
    %682 = vmatpush2.msra.mxu0 0.0
    %683 = vmatprep.subr.mxu0 0.0
    %684 = vmatpush2.msra.mxu0 0.0
    %685 = vmatprep.subr.mxu0 0.0
    %686 = vmatpush2.msra.mxu0 0.0
    %687 = vmatprep.subr.mxu0 0.0
    %688 = vmatpush2.msra.mxu0 0.0
    %689 = vmatprep.subr.mxu0 0.0
    %690 = vmatpush2.msra.mxu0 0.0
    %691 = vmatprep.subr.mxu0 0.0
    %692 = vmatpush2.msra.mxu0 0.0
    %693 = vmatprep.subr.mxu0 0.0
    %694 = vmatpush2.msra.mxu0 0.0
    %695 = vmatprep.subr.mxu0 0.0
    %696 = vmatpush2.msra.mxu0 0.0
    %697 = vmatprep.subr.mxu0 0.0
    %698 = vmatpush2.msra.mxu0 0.0
    %699 = vmatprep.mubr.f32.mxu0 0.0
    %700 = vmatmul.mubr.f32.gmra.mxu0 %v548
    %v701 = vpop.f32.mrf.mxu0
    %v702 = vadd.f32 0.0, %v701
    %v703 = vpop.f32.mrf.mxu0
    %v704 = vadd.f32 0.0, %v703
    %705 = vdwg.mxu0
    %v706 = vadd.f32 %v560, %v631
    %v707 = vadd.f32 %v561, %v633
    %v708 = vadd.f32 %v562, %v702
    %v709 = vadd.f32 %v563, %v704
    %v710 = vmul.f32 %v706, 0.5
    %v711 = vtanh.pop %v710
    %v712 = vmul.f32 %v711, 0.5
    %v713 = vadd.f32 %v712, 0.5
    %v714 = vmul.f32 %v707, 0.5
    %v715 = vtanh.pop %v714
    %v716 = vmul.f32 %v715, 0.5
    %v717 = vadd.f32 %v716, 0.5
    %v718 = vtanh.pop %v708
    %v719 = vmul.f32 %v709, 0.5
    %v720 = vtanh.pop %v719
    %v721 = vmul.f32 %v720, 0.5
    %v722 = vadd.f32 %v721, 0.5
    %v723 = vmul.f32 %v717, %v546
    %v724 = vmul.f32 %v713, %v718
    %v725 = vadd.f32 %v723, %v724
    %v726 = vtanh.pop %v725
    %v727 = vmul.f32 %v722, %v726
    %s728 = scalar_lea.vmem %s0, 32
    %v729 = vld [vmem:[%s728] sm:$0xff]
    %731 = vset.pattern.permute.xlu0 0
    %732 = vperm.xlu0 %731, %v729
    %v733 = vpop.permute.xlu0 %732
    %v735 = vmul.f32 %v733, %v63
    %v736 = vmul.f32 %v733, %v67
    %v737 = vmul.f32 %v733, %v71
    %v738 = vmul.f32 %v733, %v75
    %v739 = vadd.f32 %v735, %v88
    %v740 = vadd.f32 %v736, %v92
    %v741 = vadd.f32 %v737, %v96
    %v742 = vadd.f32 %v738, %v100
    %743 = vmatprep.subr.mxu0 %v203
    %744 = vmatpush1.msra.mxu0 %v202
    %745 = vmatprep.subr.mxu0 %v199
    %746 = vmatpush1.msra.mxu0 %v198
    %747 = vmatprep.subr.mxu0 %v195
    %748 = vmatpush1.msra.mxu0 %v194
    %749 = vmatprep.subr.mxu0 %v191
    %750 = vmatpush1.msra.mxu0 %v190
    %751 = vmatprep.subr.mxu0 %v187
    %752 = vmatpush1.msra.mxu0 %v186
    %753 = vmatprep.subr.mxu0 %v183
    %754 = vmatpush1.msra.mxu0 %v182
    %755 = vmatprep.subr.mxu0 %v179
    %756 = vmatpush1.msra.mxu0 %v178
    %757 = vmatprep.subr.mxu0 %v175
    %758 = vmatpush1.msra.mxu0 %v174
    %759 = vmatprep.subr.mxu0 %v171
    %760 = vmatpush1.msra.mxu0 %v170
    %761 = vmatprep.subr.mxu0 %v167
    %762 = vmatpush1.msra.mxu0 %v166
    %763 = vmatprep.subr.mxu0 %v163
    %764 = vmatpush1.msra.mxu0 %v162
    %765 = vmatprep.subr.mxu0 %v159
    %766 = vmatpush1.msra.mxu0 %v158
    %767 = vmatprep.subr.mxu0 %v155
    %768 = vmatpush1.msra.mxu0 %v154
    %769 = vmatprep.subr.mxu0 %v151
    %770 = vmatpush1.msra.mxu0 %v150
    %771 = vmatprep.subr.mxu0 %v147
    %772 = vmatpush1.msra.mxu0 %v146
    %773 = vmatprep.subr.mxu0 %v143
    %774 = vmatpush1.msra.mxu0 %v142
    %775 = vmatprep.subr.mxu0 0.0
    %776 = vmatpush2.msra.mxu0 0.0
    %777 = vmatprep.subr.mxu0 0.0
    %778 = vmatpush2.msra.mxu0 0.0
    %779 = vmatprep.subr.mxu0 0.0
    %780 = vmatpush2.msra.mxu0 0.0
    %781 = vmatprep.subr.mxu0 0.0
    %782 = vmatpush2.msra.mxu0 0.0
    %783 = vmatprep.subr.mxu0 0.0
    %784 = vmatpush2.msra.mxu0 0.0
    %785 = vmatprep.subr.mxu0 0.0
    %786 = vmatpush2.msra.mxu0 0.0
    %787 = vmatprep.subr.mxu0 0.0
    %788 = vmatpush2.msra.mxu0 0.0
    %789 = vmatprep.subr.mxu0 0.0
    %790 = vmatpush2.msra.mxu0 0.0
    %791 = vmatprep.subr.mxu0 0.0
    %792 = vmatpush2.msra.mxu0 0.0
    %793 = vmatprep.subr.mxu0 0.0
    %794 = vmatpush2.msra.mxu0 0.0
    %795 = vmatprep.subr.mxu0 0.0
    %796 = vmatpush2.msra.mxu0 0.0
    %797 = vmatprep.subr.mxu0 0.0
    %798 = vmatpush2.msra.mxu0 0.0
    %799 = vmatprep.subr.mxu0 0.0
    %800 = vmatpush2.msra.mxu0 0.0
    %801 = vmatprep.subr.mxu0 0.0
    %802 = vmatpush2.msra.mxu0 0.0
    %803 = vmatprep.subr.mxu0 0.0
    %804 = vmatpush2.msra.mxu0 0.0
    %805 = vmatprep.subr.mxu0 0.0
    %806 = vmatpush2.msra.mxu0 0.0
    %807 = vmatprep.mubr.f32.mxu0 0.0
    %808 = vmatmul.mubr.f32.gmra.mxu0 %v727
    %v809 = vpop.f32.mrf.mxu0
    %v810 = vadd.f32 0.0, %v809
    %v811 = vpop.f32.mrf.mxu0
    %v812 = vadd.f32 0.0, %v811
    %813 = vdwg.mxu0
    %814 = vmatprep.subr.mxu0 %v205
    %815 = vmatpush1.msra.mxu0 %v204
    %816 = vmatprep.subr.mxu0 %v201
    %817 = vmatpush1.msra.mxu0 %v200
    %818 = vmatprep.subr.mxu0 %v197
    %819 = vmatpush1.msra.mxu0 %v196
    %820 = vmatprep.subr.mxu0 %v193
    %821 = vmatpush1.msra.mxu0 %v192
    %822 = vmatprep.subr.mxu0 %v189
    %823 = vmatpush1.msra.mxu0 %v188
    %824 = vmatprep.subr.mxu0 %v185
    %825 = vmatpush1.msra.mxu0 %v184
    %826 = vmatprep.subr.mxu0 %v181
    %827 = vmatpush1.msra.mxu0 %v180
    %828 = vmatprep.subr.mxu0 %v177
    %829 = vmatpush1.msra.mxu0 %v176
    %830 = vmatprep.subr.mxu0 %v173
    %831 = vmatpush1.msra.mxu0 %v172
    %832 = vmatprep.subr.mxu0 %v169
    %833 = vmatpush1.msra.mxu0 %v168
    %834 = vmatprep.subr.mxu0 %v165
    %835 = vmatpush1.msra.mxu0 %v164
    %836 = vmatprep.subr.mxu0 %v161
    %837 = vmatpush1.msra.mxu0 %v160
    %838 = vmatprep.subr.mxu0 %v157
    %839 = vmatpush1.msra.mxu0 %v156
    %840 = vmatprep.subr.mxu0 %v153
    %841 = vmatpush1.msra.mxu0 %v152
    %842 = vmatprep.subr.mxu0 %v149
    %843 = vmatpush1.msra.mxu0 %v148
    %844 = vmatprep.subr.mxu0 %v145
    %845 = vmatpush1.msra.mxu0 %v144
    %846 = vmatprep.subr.mxu0 0.0
    %847 = vmatpush2.msra.mxu0 0.0
    %848 = vmatprep.subr.mxu0 0.0
    %849 = vmatpush2.msra.mxu0 0.0
    %850 = vmatprep.subr.mxu0 0.0
    %851 = vmatpush2.msra.mxu0 0.0
    %852 = vmatprep.subr.mxu0 0.0
    %853 = vmatpush2.msra.mxu0 0.0
    %854 = vmatprep.subr.mxu0 0.0
    %855 = vmatpush2.msra.mxu0 0.0
    %856 = vmatprep.subr.mxu0 0.0
    %857 = vmatpush2.msra.mxu0 0.0
    %858 = vmatprep.subr.mxu0 0.0
    %859 = vmatpush2.msra.mxu0 0.0
    %860 = vmatprep.subr.mxu0 0.0
    %861 = vmatpush2.msra.mxu0 0.0
    %862 = vmatprep.subr.mxu0 0.0
    %863 = vmatpush2.msra.mxu0 0.0
    %864 = vmatprep.subr.mxu0 0.0
    %865 = vmatpush2.msra.mxu0 0.0
    %866 = vmatprep.subr.mxu0 0.0
    %867 = vmatpush2.msra.mxu0 0.0
    %868 = vmatprep.subr.mxu0 0.0
    %869 = vmatpush2.msra.mxu0 0.0
    %870 = vmatprep.subr.mxu0 0.0
    %871 = vmatpush2.msra.mxu0 0.0
    %872 = vmatprep.subr.mxu0 0.0
    %873 = vmatpush2.msra.mxu0 0.0
    %874 = vmatprep.subr.mxu0 0.0
    %875 = vmatpush2.msra.mxu0 0.0
    %876 = vmatprep.subr.mxu0 0.0
    %877 = vmatpush2.msra.mxu0 0.0
    %878 = vmatprep.mubr.f32.mxu0 0.0
    %879 = vmatmul.mubr.f32.gmra.mxu0 %v727
    %v880 = vpop.f32.mrf.mxu0
    %v881 = vadd.f32 0.0, %v880
    %v882 = vpop.f32.mrf.mxu0
    %v883 = vadd.f32 0.0, %v882
    %884 = vdwg.mxu0
    %v885 = vadd.f32 %v739, %v810
    %v886 = vadd.f32 %v740, %v812
    %v887 = vadd.f32 %v741, %v881
    %v888 = vadd.f32 %v742, %v883
    %v889 = vmul.f32 %v885, 0.5
    %v890 = vtanh.pop %v889
    %v891 = vmul.f32 %v890, 0.5
    %v892 = vadd.f32 %v891, 0.5
    %v893 = vmul.f32 %v886, 0.5
    %v894 = vtanh.pop %v893
    %v895 = vmul.f32 %v894, 0.5
    %v896 = vadd.f32 %v895, 0.5
    %v897 = vtanh.pop %v887
    %v898 = vmul.f32 %v888, 0.5
    %v899 = vtanh.pop %v898
    %v900 = vmul.f32 %v899, 0.5
    %v901 = vadd.f32 %v900, 0.5
    %v902 = vmul.f32 %v896, %v725
    %v903 = vmul.f32 %v892, %v897
    %v904 = vadd.f32 %v902, %v903
    %v905 = vtanh.pop %v904
    %v906 = vmul.f32 %v901, %v905
    %s907 = scalar_lea.vmem %s0, 40
    %v908 = vld [vmem:[%s907] sm:$0xff]
    %910 = vset.pattern.permute.xlu0 0
    %911 = vperm.xlu0 %910, %v908
    %v912 = vpop.permute.xlu0 %911
    %v914 = vmul.f32 %v912, %v63
    %v915 = vmul.f32 %v912, %v67
    %v916 = vmul.f32 %v912, %v71
    %v917 = vmul.f32 %v912, %v75
    %v918 = vadd.f32 %v914, %v88
    %v919 = vadd.f32 %v915, %v92
    %v920 = vadd.f32 %v916, %v96
    %v921 = vadd.f32 %v917, %v100
    %922 = vmatprep.subr.mxu0 %v203
    %923 = vmatpush1.msra.mxu0 %v202
    %924 = vmatprep.subr.mxu0 %v199
    %925 = vmatpush1.msra.mxu0 %v198
    %926 = vmatprep.subr.mxu0 %v195
    %927 = vmatpush1.msra.mxu0 %v194
    %928 = vmatprep.subr.mxu0 %v191
    %929 = vmatpush1.msra.mxu0 %v190
    %930 = vmatprep.subr.mxu0 %v187
    %931 = vmatpush1.msra.mxu0 %v186
    %932 = vmatprep.subr.mxu0 %v183
    %933 = vmatpush1.msra.mxu0 %v182
    %934 = vmatprep.subr.mxu0 %v179
    %935 = vmatpush1.msra.mxu0 %v178
    %936 = vmatprep.subr.mxu0 %v175
    %937 = vmatpush1.msra.mxu0 %v174
    %938 = vmatprep.subr.mxu0 %v171
    %939 = vmatpush1.msra.mxu0 %v170
    %940 = vmatprep.subr.mxu0 %v167
    %941 = vmatpush1.msra.mxu0 %v166
    %942 = vmatprep.subr.mxu0 %v163
    %943 = vmatpush1.msra.mxu0 %v162
    %944 = vmatprep.subr.mxu0 %v159
    %945 = vmatpush1.msra.mxu0 %v158
    %946 = vmatprep.subr.mxu0 %v155
    %947 = vmatpush1.msra.mxu0 %v154
    %948 = vmatprep.subr.mxu0 %v151
    %949 = vmatpush1.msra.mxu0 %v150
    %950 = vmatprep.subr.mxu0 %v147
    %951 = vmatpush1.msra.mxu0 %v146
    %952 = vmatprep.subr.mxu0 %v143
    %953 = vmatpush1.msra.mxu0 %v142
    %954 = vmatprep.subr.mxu0 0.0
    %955 = vmatpush2.msra.mxu0 0.0
    %956 = vmatprep.subr.mxu0 0.0
    %957 = vmatpush2.msra.mxu0 0.0
    %958 = vmatprep.subr.mxu0 0.0
    %959 = vmatpush2.msra.mxu0 0.0
    %960 = vmatprep.subr.mxu0 0.0
    %961 = vmatpush2.msra.mxu0 0.0
    %962 = vmatprep.subr.mxu0 0.0
    %963 = vmatpush2.msra.mxu0 0.0
    %964 = vmatprep.subr.mxu0 0.0
    %965 = vmatpush2.msra.mxu0 0.0
    %966 = vmatprep.subr.mxu0 0.0
    %967 = vmatpush2.msra.mxu0 0.0
    %968 = vmatprep.subr.mxu0 0.0
    %969 = vmatpush2.msra.mxu0 0.0
    %970 = vmatprep.subr.mxu0 0.0
    %971 = vmatpush2.msra.mxu0 0.0
    %972 = vmatprep.subr.mxu0 0.0
    %973 = vmatpush2.msra.mxu0 0.0
    %974 = vmatprep.subr.mxu0 0.0
    %975 = vmatpush2.msra.mxu0 0.0
    %976 = vmatprep.subr.mxu0 0.0
    %977 = vmatpush2.msra.mxu0 0.0
    %978 = vmatprep.subr.mxu0 0.0
    %979 = vmatpush2.msra.mxu0 0.0
    %980 = vmatprep.subr.mxu0 0.0
    %981 = vmatpush2.msra.mxu0 0.0
    %982 = vmatprep.subr.mxu0 0.0
    %983 = vmatpush2.msra.mxu0 0.0
    %984 = vmatprep.subr.mxu0 0.0
    %985 = vmatpush2.msra.mxu0 0.0
    %986 = vmatprep.mubr.f32.mxu0 0.0
    %987 = vmatmul.mubr.f32.gmra.mxu0 %v906
    %v988 = vpop.f32.mrf.mxu0
    %v989 = vadd.f32 0.0, %v988
    %v990 = vpop.f32.mrf.mxu0
    %v991 = vadd.f32 0.0, %v990
    %992 = vdwg.mxu0
    %993 = vmatprep.subr.mxu0 %v205
    %994 = vmatpush1.msra.mxu0 %v204
    %995 = vmatprep.subr.mxu0 %v201
    %996 = vmatpush1.msra.mxu0 %v200
    %997 = vmatprep.subr.mxu0 %v197
    %998 = vmatpush1.msra.mxu0 %v196
    %999 = vmatprep.subr.mxu0 %v193
    %1000 = vmatpush1.msra.mxu0 %v192
    %1001 = vmatprep.subr.mxu0 %v189
    %1002 = vmatpush1.msra.mxu0 %v188
    %1003 = vmatprep.subr.mxu0 %v185
    %1004 = vmatpush1.msra.mxu0 %v184
    %1005 = vmatprep.subr.mxu0 %v181
    %1006 = vmatpush1.msra.mxu0 %v180
    %1007 = vmatprep.subr.mxu0 %v177
    %1008 = vmatpush1.msra.mxu0 %v176
    %1009 = vmatprep.subr.mxu0 %v173
    %1010 = vmatpush1.msra.mxu0 %v172
    %1011 = vmatprep.subr.mxu0 %v169
    %1012 = vmatpush1.msra.mxu0 %v168
    %1013 = vmatprep.subr.mxu0 %v165
    %1014 = vmatpush1.msra.mxu0 %v164
    %1015 = vmatprep.subr.mxu0 %v161
    %1016 = vmatpush1.msra.mxu0 %v160
    %1017 = vmatprep.subr.mxu0 %v157
    %1018 = vmatpush1.msra.mxu0 %v156
    %1019 = vmatprep.subr.mxu0 %v153
    %1020 = vmatpush1.msra.mxu0 %v152
    %1021 = vmatprep.subr.mxu0 %v149
    %1022 = vmatpush1.msra.mxu0 %v148
    %1023 = vmatprep.subr.mxu0 %v145
    %1024 = vmatpush1.msra.mxu0 %v144
    %1025 = vmatprep.subr.mxu0 0.0
    %1026 = vmatpush2.msra.mxu0 0.0
    %1027 = vmatprep.subr.mxu0 0.0
    %1028 = vmatpush2.msra.mxu0 0.0
    %1029 = vmatprep.subr.mxu0 0.0
    %1030 = vmatpush2.msra.mxu0 0.0
    %1031 = vmatprep.subr.mxu0 0.0
    %1032 = vmatpush2.msra.mxu0 0.0
    %1033 = vmatprep.subr.mxu0 0.0
    %1034 = vmatpush2.msra.mxu0 0.0
    %1035 = vmatprep.subr.mxu0 0.0
    %1036 = vmatpush2.msra.mxu0 0.0
    %1037 = vmatprep.subr.mxu0 0.0
    %1038 = vmatpush2.msra.mxu0 0.0
    %1039 = vmatprep.subr.mxu0 0.0
    %1040 = vmatpush2.msra.mxu0 0.0
    %1041 = vmatprep.subr.mxu0 0.0
    %1042 = vmatpush2.msra.mxu0 0.0
    %1043 = vmatprep.subr.mxu0 0.0
    %1044 = vmatpush2.msra.mxu0 0.0
    %1045 = vmatprep.subr.mxu0 0.0
    %1046 = vmatpush2.msra.mxu0 0.0
    %1047 = vmatprep.subr.mxu0 0.0
    %1048 = vmatpush2.msra.mxu0 0.0
    %1049 = vmatprep.subr.mxu0 0.0
    %1050 = vmatpush2.msra.mxu0 0.0
    %1051 = vmatprep.subr.mxu0 0.0
    %1052 = vmatpush2.msra.mxu0 0.0
    %1053 = vmatprep.subr.mxu0 0.0
    %1054 = vmatpush2.msra.mxu0 0.0
    %1055 = vmatprep.subr.mxu0 0.0
    %1056 = vmatpush2.msra.mxu0 0.0
    %1057 = vmatprep.mubr.f32.mxu0 0.0
    %1058 = vmatmul.mubr.f32.gmra.mxu0 %v906
    %v1059 = vpop.f32.mrf.mxu0
    %v1060 = vadd.f32 0.0, %v1059
    %v1061 = vpop.f32.mrf.mxu0
    %v1062 = vadd.f32 0.0, %v1061
    %1063 = vdwg.mxu0
    %v1064 = vadd.f32 %v918, %v989
    %v1065 = vadd.f32 %v919, %v991
    %v1066 = vadd.f32 %v920, %v1060
    %v1067 = vadd.f32 %v921, %v1062
    %v1068 = vmul.f32 %v1064, 0.5
    %v1069 = vtanh.pop %v1068
    %v1070 = vmul.f32 %v1069, 0.5
    %v1071 = vadd.f32 %v1070, 0.5
    %v1072 = vmul.f32 %v1065, 0.5
    %v1073 = vtanh.pop %v1072
    %v1074 = vmul.f32 %v1073, 0.5
    %v1075 = vadd.f32 %v1074, 0.5
    %v1076 = vtanh.pop %v1066
    %v1077 = vmul.f32 %v1067, 0.5
    %v1078 = vtanh.pop %v1077
    %v1079 = vmul.f32 %v1078, 0.5
    %v1080 = vadd.f32 %v1079, 0.5
    %v1081 = vmul.f32 %v1075, %v904
    %v1082 = vmul.f32 %v1071, %v1076
    %v1083 = vadd.f32 %v1081, %v1082
    %v1084 = vtanh.pop %v1083
    %v1085 = vmul.f32 %v1080, %v1084
    %s1086 = scalar_lea.vmem %s0, 48
    %v1087 = vld [vmem:[%s1086] sm:$0xff]
    %1089 = vset.pattern.permute.xlu0 0
    %1090 = vperm.xlu0 %1089, %v1087
    %v1091 = vpop.permute.xlu0 %1090
    %v1093 = vmul.f32 %v1091, %v63
    %v1094 = vmul.f32 %v1091, %v67
    %v1095 = vmul.f32 %v1091, %v71
    %v1096 = vmul.f32 %v1091, %v75
    %v1097 = vadd.f32 %v1093, %v88
    %v1098 = vadd.f32 %v1094, %v92
    %v1099 = vadd.f32 %v1095, %v96
    %v1100 = vadd.f32 %v1096, %v100
    %1101 = vmatprep.subr.mxu0 %v203
    %1102 = vmatpush1.msra.mxu0 %v202
    %1103 = vmatprep.subr.mxu0 %v199
    %1104 = vmatpush1.msra.mxu0 %v198
    %1105 = vmatprep.subr.mxu0 %v195
    %1106 = vmatpush1.msra.mxu0 %v194
    %1107 = vmatprep.subr.mxu0 %v191
    %1108 = vmatpush1.msra.mxu0 %v190
    %1109 = vmatprep.subr.mxu0 %v187
    %1110 = vmatpush1.msra.mxu0 %v186
    %1111 = vmatprep.subr.mxu0 %v183
    %1112 = vmatpush1.msra.mxu0 %v182
    %1113 = vmatprep.subr.mxu0 %v179
    %1114 = vmatpush1.msra.mxu0 %v178
    %1115 = vmatprep.subr.mxu0 %v175
    %1116 = vmatpush1.msra.mxu0 %v174
    %1117 = vmatprep.subr.mxu0 %v171
    %1118 = vmatpush1.msra.mxu0 %v170
    %1119 = vmatprep.subr.mxu0 %v167
    %1120 = vmatpush1.msra.mxu0 %v166
    %1121 = vmatprep.subr.mxu0 %v163
    %1122 = vmatpush1.msra.mxu0 %v162
    %1123 = vmatprep.subr.mxu0 %v159
    %1124 = vmatpush1.msra.mxu0 %v158
    %1125 = vmatprep.subr.mxu0 %v155
    %1126 = vmatpush1.msra.mxu0 %v154
    %1127 = vmatprep.subr.mxu0 %v151
    %1128 = vmatpush1.msra.mxu0 %v150
    %1129 = vmatprep.subr.mxu0 %v147
    %1130 = vmatpush1.msra.mxu0 %v146
    %1131 = vmatprep.subr.mxu0 %v143
    %1132 = vmatpush1.msra.mxu0 %v142
    %1133 = vmatprep.subr.mxu0 0.0
    %1134 = vmatpush2.msra.mxu0 0.0
    %1135 = vmatprep.subr.mxu0 0.0
    %1136 = vmatpush2.msra.mxu0 0.0
    %1137 = vmatprep.subr.mxu0 0.0
    %1138 = vmatpush2.msra.mxu0 0.0
    %1139 = vmatprep.subr.mxu0 0.0
    %1140 = vmatpush2.msra.mxu0 0.0
    %1141 = vmatprep.subr.mxu0 0.0
    %1142 = vmatpush2.msra.mxu0 0.0
    %1143 = vmatprep.subr.mxu0 0.0
    %1144 = vmatpush2.msra.mxu0 0.0
    %1145 = vmatprep.subr.mxu0 0.0
    %1146 = vmatpush2.msra.mxu0 0.0
    %1147 = vmatprep.subr.mxu0 0.0
    %1148 = vmatpush2.msra.mxu0 0.0
    %1149 = vmatprep.subr.mxu0 0.0
    %1150 = vmatpush2.msra.mxu0 0.0
    %1151 = vmatprep.subr.mxu0 0.0
    %1152 = vmatpush2.msra.mxu0 0.0
    %1153 = vmatprep.subr.mxu0 0.0
    %1154 = vmatpush2.msra.mxu0 0.0
    %1155 = vmatprep.subr.mxu0 0.0
    %1156 = vmatpush2.msra.mxu0 0.0
    %1157 = vmatprep.subr.mxu0 0.0
    %1158 = vmatpush2.msra.mxu0 0.0
    %1159 = vmatprep.subr.mxu0 0.0
    %1160 = vmatpush2.msra.mxu0 0.0
    %1161 = vmatprep.subr.mxu0 0.0
    %1162 = vmatpush2.msra.mxu0 0.0
    %1163 = vmatprep.subr.mxu0 0.0
    %1164 = vmatpush2.msra.mxu0 0.0
    %1165 = vmatprep.mubr.f32.mxu0 0.0
    %1166 = vmatmul.mubr.f32.gmra.mxu0 %v1085
    %v1167 = vpop.f32.mrf.mxu0
    %v1168 = vadd.f32 0.0, %v1167
    %v1169 = vpop.f32.mrf.mxu0
    %v1170 = vadd.f32 0.0, %v1169
    %1171 = vdwg.mxu0
    %1172 = vmatprep.subr.mxu0 %v205
    %1173 = vmatpush1.msra.mxu0 %v204
    %1174 = vmatprep.subr.mxu0 %v201
    %1175 = vmatpush1.msra.mxu0 %v200
    %1176 = vmatprep.subr.mxu0 %v197
    %1177 = vmatpush1.msra.mxu0 %v196
    %1178 = vmatprep.subr.mxu0 %v193
    %1179 = vmatpush1.msra.mxu0 %v192
    %1180 = vmatprep.subr.mxu0 %v189
    %1181 = vmatpush1.msra.mxu0 %v188
    %1182 = vmatprep.subr.mxu0 %v185
    %1183 = vmatpush1.msra.mxu0 %v184
    %1184 = vmatprep.subr.mxu0 %v181
    %1185 = vmatpush1.msra.mxu0 %v180
    %1186 = vmatprep.subr.mxu0 %v177
    %1187 = vmatpush1.msra.mxu0 %v176
    %1188 = vmatprep.subr.mxu0 %v173
    %1189 = vmatpush1.msra.mxu0 %v172
    %1190 = vmatprep.subr.mxu0 %v169
    %1191 = vmatpush1.msra.mxu0 %v168
    %1192 = vmatprep.subr.mxu0 %v165
    %1193 = vmatpush1.msra.mxu0 %v164
    %1194 = vmatprep.subr.mxu0 %v161
    %1195 = vmatpush1.msra.mxu0 %v160
    %1196 = vmatprep.subr.mxu0 %v157
    %1197 = vmatpush1.msra.mxu0 %v156
    %1198 = vmatprep.subr.mxu0 %v153
    %1199 = vmatpush1.msra.mxu0 %v152
    %1200 = vmatprep.subr.mxu0 %v149
    %1201 = vmatpush1.msra.mxu0 %v148
    %1202 = vmatprep.subr.mxu0 %v145
    %1203 = vmatpush1.msra.mxu0 %v144
    %1204 = vmatprep.subr.mxu0 0.0
    %1205 = vmatpush2.msra.mxu0 0.0
    %1206 = vmatprep.subr.mxu0 0.0
    %1207 = vmatpush2.msra.mxu0 0.0
    %1208 = vmatprep.subr.mxu0 0.0
    %1209 = vmatpush2.msra.mxu0 0.0
    %1210 = vmatprep.subr.mxu0 0.0
    %1211 = vmatpush2.msra.mxu0 0.0
    %1212 = vmatprep.subr.mxu0 0.0
    %1213 = vmatpush2.msra.mxu0 0.0
    %1214 = vmatprep.subr.mxu0 0.0
    %1215 = vmatpush2.msra.mxu0 0.0
    %1216 = vmatprep.subr.mxu0 0.0
    %1217 = vmatpush2.msra.mxu0 0.0
    %1218 = vmatprep.subr.mxu0 0.0
    %1219 = vmatpush2.msra.mxu0 0.0
    %1220 = vmatprep.subr.mxu0 0.0
    %1221 = vmatpush2.msra.mxu0 0.0
    %1222 = vmatprep.subr.mxu0 0.0
    %1223 = vmatpush2.msra.mxu0 0.0
    %1224 = vmatprep.subr.mxu0 0.0
    %1225 = vmatpush2.msra.mxu0 0.0
    %1226 = vmatprep.subr.mxu0 0.0
    %1227 = vmatpush2.msra.mxu0 0.0
    %1228 = vmatprep.subr.mxu0 0.0
    %1229 = vmatpush2.msra.mxu0 0.0
    %1230 = vmatprep.subr.mxu0 0.0
    %1231 = vmatpush2.msra.mxu0 0.0
    %1232 = vmatprep.subr.mxu0 0.0
    %1233 = vmatpush2.msra.mxu0 0.0
    %1234 = vmatprep.subr.mxu0 0.0
    %1235 = vmatpush2.msra.mxu0 0.0
    %1236 = vmatprep.mubr.f32.mxu0 0.0
    %1237 = vmatmul.mubr.f32.gmra.mxu0 %v1085
    %v1238 = vpop.f32.mrf.mxu0
    %v1239 = vadd.f32 0.0, %v1238
    %v1240 = vpop.f32.mrf.mxu0
    %v1241 = vadd.f32 0.0, %v1240
    %1242 = vdwg.mxu0
    %v1243 = vadd.f32 %v1097, %v1168
    %v1244 = vadd.f32 %v1098, %v1170
    %v1245 = vadd.f32 %v1099, %v1239
    %v1246 = vadd.f32 %v1100, %v1241
    %v1247 = vmul.f32 %v1243, 0.5
    %v1248 = vtanh.pop %v1247
    %v1249 = vmul.f32 %v1248, 0.5
    %v1250 = vadd.f32 %v1249, 0.5
    %v1251 = vmul.f32 %v1244, 0.5
    %v1252 = vtanh.pop %v1251
    %v1253 = vmul.f32 %v1252, 0.5
    %v1254 = vadd.f32 %v1253, 0.5
    %v1255 = vtanh.pop %v1245
    %v1256 = vmul.f32 %v1246, 0.5
    %v1257 = vtanh.pop %v1256
    %v1258 = vmul.f32 %v1257, 0.5
    %v1259 = vadd.f32 %v1258, 0.5
    %v1260 = vmul.f32 %v1254, %v1083
    %v1261 = vmul.f32 %v1250, %v1255
    %v1262 = vadd.f32 %v1260, %v1261
    %v1263 = vtanh.pop %v1262
    %v1264 = vmul.f32 %v1259, %v1263
    %s1265 = scalar_lea.vmem %s0, 56
    %v1266 = vld [vmem:[%s1265] sm:$0xff]
    %1268 = vset.pattern.permute.xlu0 0
    %1269 = vperm.xlu0 %1268, %v1266
    %v1270 = vpop.permute.xlu0 %1269
    %v1272 = vmul.f32 %v1270, %v63
    %v1273 = vmul.f32 %v1270, %v67
    %v1274 = vmul.f32 %v1270, %v71
    %v1275 = vmul.f32 %v1270, %v75
    %v1276 = vadd.f32 %v1272, %v88
    %v1277 = vadd.f32 %v1273, %v92
    %v1278 = vadd.f32 %v1274, %v96
    %v1279 = vadd.f32 %v1275, %v100
    %1280 = vmatprep.subr.mxu0 %v203
    %1281 = vmatpush1.msra.mxu0 %v202
    %1282 = vmatprep.subr.mxu0 %v199
    %1283 = vmatpush1.msra.mxu0 %v198
    %1284 = vmatprep.subr.mxu0 %v195
    %1285 = vmatpush1.msra.mxu0 %v194
    %1286 = vmatprep.subr.mxu0 %v191
    %1287 = vmatpush1.msra.mxu0 %v190
    %1288 = vmatprep.subr.mxu0 %v187
    %1289 = vmatpush1.msra.mxu0 %v186
    %1290 = vmatprep.subr.mxu0 %v183
    %1291 = vmatpush1.msra.mxu0 %v182
    %1292 = vmatprep.subr.mxu0 %v179
    %1293 = vmatpush1.msra.mxu0 %v178
    %1294 = vmatprep.subr.mxu0 %v175
    %1295 = vmatpush1.msra.mxu0 %v174
    %1296 = vmatprep.subr.mxu0 %v171
    %1297 = vmatpush1.msra.mxu0 %v170
    %1298 = vmatprep.subr.mxu0 %v167
    %1299 = vmatpush1.msra.mxu0 %v166
    %1300 = vmatprep.subr.mxu0 %v163
    %1301 = vmatpush1.msra.mxu0 %v162
    %1302 = vmatprep.subr.mxu0 %v159
    %1303 = vmatpush1.msra.mxu0 %v158
    %1304 = vmatprep.subr.mxu0 %v155
    %1305 = vmatpush1.msra.mxu0 %v154
    %1306 = vmatprep.subr.mxu0 %v151
    %1307 = vmatpush1.msra.mxu0 %v150
    %1308 = vmatprep.subr.mxu0 %v147
    %1309 = vmatpush1.msra.mxu0 %v146
    %1310 = vmatprep.subr.mxu0 %v143
    %1311 = vmatpush1.msra.mxu0 %v142
    %1312 = vmatprep.subr.mxu0 0.0
    %1313 = vmatpush2.msra.mxu0 0.0
    %1314 = vmatprep.subr.mxu0 0.0
    %1315 = vmatpush2.msra.mxu0 0.0
    %1316 = vmatprep.subr.mxu0 0.0
    %1317 = vmatpush2.msra.mxu0 0.0
    %1318 = vmatprep.subr.mxu0 0.0
    %1319 = vmatpush2.msra.mxu0 0.0
    %1320 = vmatprep.subr.mxu0 0.0
    %1321 = vmatpush2.msra.mxu0 0.0
    %1322 = vmatprep.subr.mxu0 0.0
    %1323 = vmatpush2.msra.mxu0 0.0
    %1324 = vmatprep.subr.mxu0 0.0
    %1325 = vmatpush2.msra.mxu0 0.0
    %1326 = vmatprep.subr.mxu0 0.0
    %1327 = vmatpush2.msra.mxu0 0.0
    %1328 = vmatprep.subr.mxu0 0.0
    %1329 = vmatpush2.msra.mxu0 0.0
    %1330 = vmatprep.subr.mxu0 0.0
    %1331 = vmatpush2.msra.mxu0 0.0
    %1332 = vmatprep.subr.mxu0 0.0
    %1333 = vmatpush2.msra.mxu0 0.0
    %1334 = vmatprep.subr.mxu0 0.0
    %1335 = vmatpush2.msra.mxu0 0.0
    %1336 = vmatprep.subr.mxu0 0.0
    %1337 = vmatpush2.msra.mxu0 0.0
    %1338 = vmatprep.subr.mxu0 0.0
    %1339 = vmatpush2.msra.mxu0 0.0
    %1340 = vmatprep.subr.mxu0 0.0
    %1341 = vmatpush2.msra.mxu0 0.0
    %1342 = vmatprep.subr.mxu0 0.0
    %1343 = vmatpush2.msra.mxu0 0.0
    %1344 = vmatprep.mubr.f32.mxu0 0.0
    %1345 = vmatmul.mubr.f32.gmra.mxu0 %v1264
    %v1346 = vpop.f32.mrf.mxu0
    %v1347 = vadd.f32 0.0, %v1346
    %v1348 = vpop.f32.mrf.mxu0
    %v1349 = vadd.f32 0.0, %v1348
    %1350 = vdwg.mxu0
    %1351 = vmatprep.subr.mxu0 %v205
    %1352 = vmatpush1.msra.mxu0 %v204
    %1353 = vmatprep.subr.mxu0 %v201
    %1354 = vmatpush1.msra.mxu0 %v200
    %1355 = vmatprep.subr.mxu0 %v197
    %1356 = vmatpush1.msra.mxu0 %v196
    %1357 = vmatprep.subr.mxu0 %v193
    %1358 = vmatpush1.msra.mxu0 %v192
    %1359 = vmatprep.subr.mxu0 %v189
    %1360 = vmatpush1.msra.mxu0 %v188
    %1361 = vmatprep.subr.mxu0 %v185
    %1362 = vmatpush1.msra.mxu0 %v184
    %1363 = vmatprep.subr.mxu0 %v181
    %1364 = vmatpush1.msra.mxu0 %v180
    %1365 = vmatprep.subr.mxu0 %v177
    %1366 = vmatpush1.msra.mxu0 %v176
    %1367 = vmatprep.subr.mxu0 %v173
    %1368 = vmatpush1.msra.mxu0 %v172
    %1369 = vmatprep.subr.mxu0 %v169
    %1370 = vmatpush1.msra.mxu0 %v168
    %1371 = vmatprep.subr.mxu0 %v165
    %1372 = vmatpush1.msra.mxu0 %v164
    %1373 = vmatprep.subr.mxu0 %v161
    %1374 = vmatpush1.msra.mxu0 %v160
    %1375 = vmatprep.subr.mxu0 %v157
    %1376 = vmatpush1.msra.mxu0 %v156
    %1377 = vmatprep.subr.mxu0 %v153
    %1378 = vmatpush1.msra.mxu0 %v152
    %1379 = vmatprep.subr.mxu0 %v149
    %1380 = vmatpush1.msra.mxu0 %v148
    %1381 = vmatprep.subr.mxu0 %v145
    %1382 = vmatpush1.msra.mxu0 %v144
    %1383 = vmatprep.subr.mxu0 0.0
    %1384 = vmatpush2.msra.mxu0 0.0
    %1385 = vmatprep.subr.mxu0 0.0
    %1386 = vmatpush2.msra.mxu0 0.0
    %1387 = vmatprep.subr.mxu0 0.0
    %1388 = vmatpush2.msra.mxu0 0.0
    %1389 = vmatprep.subr.mxu0 0.0
    %1390 = vmatpush2.msra.mxu0 0.0
    %1391 = vmatprep.subr.mxu0 0.0
    %1392 = vmatpush2.msra.mxu0 0.0
    %1393 = vmatprep.subr.mxu0 0.0
    %1394 = vmatpush2.msra.mxu0 0.0
    %1395 = vmatprep.subr.mxu0 0.0
    %1396 = vmatpush2.msra.mxu0 0.0
    %1397 = vmatprep.subr.mxu0 0.0
    %1398 = vmatpush2.msra.mxu0 0.0
    %1399 = vmatprep.subr.mxu0 0.0
    %1400 = vmatpush2.msra.mxu0 0.0
    %1401 = vmatprep.subr.mxu0 0.0
    %1402 = vmatpush2.msra.mxu0 0.0
    %1403 = vmatprep.subr.mxu0 0.0
    %1404 = vmatpush2.msra.mxu0 0.0
    %1405 = vmatprep.subr.mxu0 0.0
    %1406 = vmatpush2.msra.mxu0 0.0
    %1407 = vmatprep.subr.mxu0 0.0
    %1408 = vmatpush2.msra.mxu0 0.0
    %1409 = vmatprep.subr.mxu0 0.0
    %1410 = vmatpush2.msra.mxu0 0.0
    %1411 = vmatprep.subr.mxu0 0.0
    %1412 = vmatpush2.msra.mxu0 0.0
    %1413 = vmatprep.subr.mxu0 0.0
    %1414 = vmatpush2.msra.mxu0 0.0
    %1415 = vmatprep.mubr.f32.mxu0 0.0
    %1416 = vmatmul.mubr.f32.gmra.mxu0 %v1264
    %v1417 = vpop.f32.mrf.mxu0
    %v1418 = vadd.f32 0.0, %v1417
    %v1419 = vpop.f32.mrf.mxu0
    %v1420 = vadd.f32 0.0, %v1419
    %1421 = vdwg.mxu0
    %v1422 = vadd.f32 %v1276, %v1347
    %v1423 = vadd.f32 %v1277, %v1349
    %v1424 = vadd.f32 %v1278, %v1418
    %v1425 = vadd.f32 %v1279, %v1420
    %v1426 = vmul.f32 %v1422, 0.5
    %v1427 = vtanh.pop %v1426
    %v1428 = vmul.f32 %v1427, 0.5
    %v1429 = vadd.f32 %v1428, 0.5
    %v1430 = vmul.f32 %v1423, 0.5
    %v1431 = vtanh.pop %v1430
    %v1432 = vmul.f32 %v1431, 0.5
    %v1433 = vadd.f32 %v1432, 0.5
    %v1434 = vtanh.pop %v1424
    %v1435 = vmul.f32 %v1425, 0.5
    %v1436 = vtanh.pop %v1435
    %v1437 = vmul.f32 %v1436, 0.5
    %v1438 = vadd.f32 %v1437, 0.5
    %v1439 = vmul.f32 %v1433, %v1262
    %v1440 = vmul.f32 %v1429, %v1434
    %v1441 = vadd.f32 %v1439, %v1440
    %v1442 = vtanh.pop %v1441
    %v1443 = vmul.f32 %v1438, %v1442
    %v1444 = vld [vmem:[#allocation4] sm:$0xff]
    %v1445 = vld [vmem:[#allocation4 + $0x8] sm:$0xff]
    %v1446 = vld [vmem:[#allocation4 + $0x10] sm:$0xff]
    %v1447 = vld [vmem:[#allocation4 + $0x18] sm:$0xff]
    %v1448 = vld [vmem:[#allocation4 + $0x20] sm:$0xff]
    %v1449 = vld [vmem:[#allocation4 + $0x28] sm:$0xff]
    %v1450 = vld [vmem:[#allocation4 + $0x30] sm:$0xff]
    %v1451 = vld [vmem:[#allocation4 + $0x38] sm:$0xff]
    %v1452 = vld [vmem:[#allocation4 + $0x40] sm:$0xff]
    %v1453 = vld [vmem:[#allocation4 + $0x48] sm:$0xff]
    %v1454 = vld [vmem:[#allocation4 + $0x50] sm:$0xff]
    %v1455 = vld [vmem:[#allocation4 + $0x58] sm:$0xff]
    %v1456 = vld [vmem:[#allocation4 + $0x60] sm:$0xff]
    %v1457 = vld [vmem:[#allocation4 + $0x68] sm:$0xff]
    %v1458 = vld [vmem:[#allocation4 + $0x70] sm:$0xff]
    %v1459 = vld [vmem:[#allocation4 + $0x78] sm:$0xff]
    %v1460 = vld [vmem:[%s5] sm:$0x1]
    %v1462 = vlaneseq
    %v1463 = vshrl.u32 %v1462, 7
    %v1464 = vsub.s32 0, %v1463
    %v1465 = vrot.slane %v1460, %v1464
    %1467 = vmatprep.subr.mxu0 0.0
    %1468 = vmatpush1.msra.mxu0 %v1459
    %1469 = vmatprep.subr.mxu0 0.0
    %1470 = vmatpush1.msra.mxu0 %v1458
    %1471 = vmatprep.subr.mxu0 0.0
    %1472 = vmatpush1.msra.mxu0 %v1457
    %1473 = vmatprep.subr.mxu0 0.0
    %1474 = vmatpush1.msra.mxu0 %v1456
    %1475 = vmatprep.subr.mxu0 0.0
    %1476 = vmatpush1.msra.mxu0 %v1455
    %1477 = vmatprep.subr.mxu0 0.0
    %1478 = vmatpush1.msra.mxu0 %v1454
    %1479 = vmatprep.subr.mxu0 0.0
    %1480 = vmatpush1.msra.mxu0 %v1453
    %1481 = vmatprep.subr.mxu0 0.0
    %1482 = vmatpush1.msra.mxu0 %v1452
    %1483 = vmatprep.subr.mxu0 0.0
    %1484 = vmatpush1.msra.mxu0 %v1451
    %1485 = vmatprep.subr.mxu0 0.0
    %1486 = vmatpush1.msra.mxu0 %v1450
    %1487 = vmatprep.subr.mxu0 0.0
    %1488 = vmatpush1.msra.mxu0 %v1449
    %1489 = vmatprep.subr.mxu0 0.0
    %1490 = vmatpush1.msra.mxu0 %v1448
    %1491 = vmatprep.subr.mxu0 0.0
    %1492 = vmatpush1.msra.mxu0 %v1447
    %1493 = vmatprep.subr.mxu0 0.0
    %1494 = vmatpush1.msra.mxu0 %v1446
    %1495 = vmatprep.subr.mxu0 0.0
    %1496 = vmatpush1.msra.mxu0 %v1445
    %1497 = vmatprep.subr.mxu0 0.0
    %1498 = vmatpush1.msra.mxu0 %v1444
    %1499 = vmatprep.subr.mxu0 0.0
    %1500 = vmatpush2.msra.mxu0 0.0
    %1501 = vmatprep.subr.mxu0 0.0
    %1502 = vmatpush2.msra.mxu0 0.0
    %1503 = vmatprep.subr.mxu0 0.0
    %1504 = vmatpush2.msra.mxu0 0.0
    %1505 = vmatprep.subr.mxu0 0.0
    %1506 = vmatpush2.msra.mxu0 0.0
    %1507 = vmatprep.subr.mxu0 0.0
    %1508 = vmatpush2.msra.mxu0 0.0
    %1509 = vmatprep.subr.mxu0 0.0
    %1510 = vmatpush2.msra.mxu0 0.0
    %1511 = vmatprep.subr.mxu0 0.0
    %1512 = vmatpush2.msra.mxu0 0.0
    %1513 = vmatprep.subr.mxu0 0.0
    %1514 = vmatpush2.msra.mxu0 0.0
    %1515 = vmatprep.subr.mxu0 0.0
    %1516 = vmatpush2.msra.mxu0 0.0
    %1517 = vmatprep.subr.mxu0 0.0
    %1518 = vmatpush2.msra.mxu0 0.0
    %1519 = vmatprep.subr.mxu0 0.0
    %1520 = vmatpush2.msra.mxu0 0.0
    %1521 = vmatprep.subr.mxu0 0.0
    %1522 = vmatpush2.msra.mxu0 0.0
    %1523 = vmatprep.subr.mxu0 0.0
    %1524 = vmatpush2.msra.mxu0 0.0
    %1525 = vmatprep.subr.mxu0 0.0
    %1526 = vmatpush2.msra.mxu0 0.0
    %1527 = vmatprep.subr.mxu0 0.0
    %1528 = vmatpush2.msra.mxu0 0.0
    %1529 = vmatprep.subr.mxu0 0.0
    %1530 = vmatpush2.msra.mxu0 0.0
    %1531 = vmatprep.mubr.f32.mxu0 0.0
    %1532 = vmatmul.mubr.f32.gmra.mxu0 %v1443
    %v1533 = vpop.f32.mrf.mxu0
    %v1534 = vadd.f32 %v1465, %v1533
    %v1535 = vpop.f32.mrf.mxu0
    %1536 = vdwg.mxu0
    %1537 = vst [vmem:[%s6] sm:$0xff] %v1534
    // Predicated region
    $region34: #{_forward_impl.1} parent=1 // pred_check
      _
    $region35: #{_forward_impl.1} parent=1 // pred_check_branch
      %1539 = sbr.rel (0) target = $region37
    $region36: #{_forward_impl.1} parent=1 // pred_region
      _
    $region37: #{_forward_impl.1} parent=1 // pred_fallthru
      _
    // Predicated region
    $region38: #{_forward_impl.1} parent=1 // pred_check
      _
    $region39: #{_forward_impl.1} parent=1 // pred_check_branch
      %1541 = sbr.rel (0) target = $region41
    $region40: #{_forward_impl.1} parent=1 // pred_region
      _
    $region41: #{_forward_impl.1} parent=1 // pred_fallthru
      _
    %1542 = vsyncpa [#allocation3], 1
    %1543 = vsyncpa [#allocation5], 1

</llo_original>
